<compile_context>
chip_gen: v6e
topology: v6e:2x2x1
jax: 0.10.0
libtpu: 0.0.40
codegen_flags: <defaults>
</compile_context>

<pallas_src>
import functools

import jax
import jax.numpy as jnp
from jax import lax
from jax.experimental import pallas as pl
from jax.experimental.pallas import tpu as pltpu


def _lane_bcast(x_rep, tk):
    """Broadcast a lane-replicated (tq, 128) f32 array to (tq, tk)."""
    tq, lanes = x_rep.shape
    if tk == lanes:
        return x_rep
    if tk < lanes:
        return x_rep[:, :tk]              # all lanes equal -> any slice works
    if tk % lanes == 0:
        return jnp.tile(x_rep, (1, tk // lanes))
    return jnp.broadcast_to(x_rep[:, :1], (tq, tk))


def _nce_tile_kernel(q_ref, pos_ref, k_ref, out_ref,
                     m_ref, l_ref, gt_ref,
                     *, B, tq, tk, inv_temp, static_max):
    i = pl.program_id(0)          # query-tile index (over 2B rows)
    j = pl.program_id(1)          # key-tile index   (over 2B cols)
    nk = pl.num_programs(1)

    q0 = i * tq                   # first global query row of this tile
    r0 = q0 % B                   # its own-modality row index
    k0 = j * tk                   # first global key column of this tile
    d1 = r0 - k0                  # diagonal: col == (q mod B)      (self-sim)
    d2 = r0 + B - k0              # diagonal: col == (q mod B) + B  (dup positive)

    # ---- new query tile: init running stats (positive term folded in) --------
    @pl.when(j == 0)
    def _init():
        if static_max:
            # scores are bounded by inv_temp (unit-norm rows), so the softmax
            # max is a compile-time constant; seed l with the positive's term.
            l_ref[...] = jnp.exp(pos_ref[...] - inv_temp)
        else:
            m_ref[...] = pos_ref[...]
            l_ref[...] = jnp.ones_like(l_ref)     # exp(pos - m) == 1
        gt_ref[...] = jnp.zeros_like(gt_ref)

    # ---- scores for this tile pair: bf16 operands on the MXU, f32 accumulate --
    s = lax.dot_general(q_ref[...], k_ref[...],
                        (((1,), (1,)), ((), ())),
                        preferred_element_type=jnp.float32)    # (tq, tk) f32

    pos_b = _lane_bcast(pos_ref[...], tk)                      # (tq, tk)

    def _update(valid):
        if static_max:
            p = jnp.exp(s - inv_temp)
            if valid is not None:
                p = jnp.where(valid, p, 0.0)
            l_ref[...] = l_ref[...] + jnp.sum(p, axis=-1, keepdims=True)
        else:
            m_prev = m_ref[...]                                # (tq, 128)
            if valid is None:
                row_max = jnp.max(s, axis=-1, keepdims=True)
            else:
                row_max = jnp.max(jnp.where(valid, s, -jnp.inf),
                                  axis=-1, keepdims=True)
            m_new = jnp.maximum(m_prev, row_max)
            alpha = jnp.exp(m_prev - m_new)
            p = jnp.exp(s - _lane_bcast(m_new, tk))
            if valid is not None:
                p = jnp.where(valid, p, 0.0)
            l_ref[...] = l_ref[...] * alpha + jnp.sum(p, axis=-1, keepdims=True)
            m_ref[...] = m_new
        gt = s > pos_b                                         # strict >: top-k count
        if valid is not None:
            gt = jnp.logical_and(gt, valid)
        gt_ref[...] = gt_ref[...] + jnp.sum(gt.astype(jnp.float32),
                                            axis=-1, keepdims=True)

    # Only tiles intersecting one of the two masked diagonals pay for
    # iota / compare / select; everything else is a pure-negative tile.
    touches = jnp.logical_or(
        jnp.logical_and(d1 > -tq, d1 < tk),
        jnp.logical_and(d2 > -tq, d2 < tk))

    @pl.when(touches)
    def _masked():
        lrow = lax.broadcasted_iota(jnp.int32, (tq, tk), 0)
        lcol = lax.broadcasted_iota(jnp.int32, (tq, tk), 1)
        delta = lcol - lrow
        excl = jnp.logical_or(delta == d1, delta == d2)
        _update(jnp.logical_not(excl))

    @pl.when(jnp.logical_not(touches))
    def _unmasked():
        _update(None)

    # ---- last key tile: emit per-query-tile partial sums ----------------------
    @pl.when(j == nk - 1)
    def _finalize():
        l_col = l_ref[...][:, 0:1]                             # lane-replicated
        gt_col = gt_ref[...][:, 0:1]
        pos_col = pos_ref[...][:, 0:1]
        if static_max:
            lse = inv_temp + jnp.log(l_col)
        else:
            lse = m_ref[...][:, 0:1] + jnp.log(l_col)
        loss_sum = jnp.sum(lse - pos_col)
        top1_sum = jnp.sum((gt_col < 1.0).astype(jnp.float32))
        top5_sum = jnp.sum((gt_col < 5.0).astype(jnp.float32))
        ridx = lax.broadcasted_iota(jnp.int32, (8, 128), 0)
        packed = jnp.where(ridx == 0, loss_sum,
                 jnp.where(ridx == 1, top1_sum,
                 jnp.where(ridx == 2, top5_sum, 0.0)))
        out_ref[...] = packed[None]                            # (1, 8, 128)


def _pick_tile(n, target):
    """Largest t <= target with t | n and t % 8 == 0, preferring lane/MXU
    aligned tiles (multiples of 128), then bf16-packing tiles (multiples of 16),
    unless alignment would cost more than 2x in tile size."""
    target = min(target, n)
    best8 = None
    t = target - target % 8
    while t >= 8:
        if n % t == 0:
            best8 = t
            break
        t -= 8
    if best8 is None:
        return n                      # unreachable when n % 8 == 0
    for align in (128, 16):
        t = target - target % align
        while t >= align:
            if n % t == 0:
                if 2 * t >= best8:
                    return t
                break
            t -= align
    return best8


def _vmem_bytes_estimate(tq, tk, d_z):
    q_stream = 2 * tq * d_z * 2          # bf16 query blocks, double-buffered
    k_stream = 2 * tk * d_z * 2          # bf16 key blocks, double-buffered
    pos_strm = 2 * tq * 128 * 4          # f32 positive-logit blocks
    out_blk = 2 * 8 * 128 * 4
    scratch = 3 * tq * 128 * 4           # m, l, gt
    temps = 6 * tq * tk * 4              # s / p / mask / compare f32 temporaries
    return q_stream + k_stream + pos_strm + out_blk + scratch + temps


def global_nce_loss(zg_1, zg_2, *, similarity_temperature=0.1,
                    block_q=512, block_k=512, use_static_max=None):
    """Returns (loss_1to2, loss_2to1, metrics) matching GlobalNceLoss.forward."""
    B, d_z = zg_1.shape
    assert zg_2.shape == (B, d_z)
    assert B % 8 == 0, "batch size must be a multiple of 8 (TPU sublane tiling)"
    # TODO(synk): pad 2B up to a tile multiple + mask the tail for batch sizes
    # that are not multiples of 8, instead of asserting.

    inv_temp = 1.0 / float(similarity_temperature)
    if use_static_max is None:
        # Scores are bounded by 1/temp for unit-norm rows; the static-max path
        # needs exp((min_cos - 1)/temp) to stay representable in f32.
        use_static_max = float(similarity_temperature) >= 0.03

    # ---- O(B*d) prep in plain JAX (layout plumbing, not the hot path) --------
    # F.normalize(p=2, dim=-1, eps=1e-12) in f32, fold sqrt(1/temp) into BOTH
    # operands, cast to bf16 for the MXU, concatenate once in HBM.
    def _norm(z):
        z = z.astype(jnp.float32)
        n = jnp.sqrt(jnp.sum(z * z, axis=-1, keepdims=True))
        return z / jnp.maximum(n, jnp.float32(1e-12))

    scale = jnp.float32(inv_temp) ** 0.5
    zb = (jnp.concatenate([_norm(zg_1), _norm(zg_2)], axis=0) * scale
          ).astype(jnp.bfloat16)                                # (2B, d_z)

    # Positive logit for all 2B query rows (rows i and i+B share the same pos),
    # lane-replicated to (2B, 128) so the kernel reads it in native vreg layout.
    zbf = zb.astype(jnp.float32)
    pos_half = jnp.sum(zbf[:B] * zbf[B:], axis=-1)              # (B,)
    pos_rep = jnp.broadcast_to(
        jnp.concatenate([pos_half, pos_half], axis=0)[:, None], (2 * B, 128))

    tq = _pick_tile(B, block_q)        # divides B -> query tile stays in one half
    tk = _pick_tile(2 * B, block_k)    # divides 2B
    nq = (2 * B) // tq
    nk = (2 * B) // tk

    est = 2 * _vmem_bytes_estimate(tq, tk, d_z)                 # 2x headroom
    vmem_limit = (min(est, 48 * 1024 * 1024)
                  if est > 32 * 1024 * 1024 else None)

    kernel = functools.partial(_nce_tile_kernel, B=B, tq=tq, tk=tk,
                               inv_temp=float(inv_temp),
                               static_max=bool(use_static_max))

    out = pl.pallas_call(
        kernel,
        out_shape=jax.ShapeDtypeStruct((nq, 8, 128), jnp.float32),
        grid_spec=pltpu.PrefetchScalarGridSpec(
            num_scalar_prefetch=0,
            grid=(nq, nk),
            in_specs=[
                pl.BlockSpec((tq, d_z), lambda i, j: (i, 0)),   # queries (bf16)
                pl.BlockSpec((tq, 128), lambda i, j: (i, 0)),   # positive logits
                pl.BlockSpec((tk, d_z), lambda i, j: (j, 0)),   # keys (bf16)
            ],
            out_specs=pl.BlockSpec((1, 8, 128), lambda i, j: (i, 0, 0)),
            scratch_shapes=[pltpu.VMEM((tq, 128), jnp.float32)] * 3,  # m, l, gt
        ),
        compiler_params=pltpu.CompilerParams(
            dimension_semantics=("parallel", "arbitrary"),
            vmem_limit_bytes=vmem_limit),
    )(zb, pos_rep, zb)

    per_tile = out[:, :3, 0]                      # (nq, 3): [loss, top1, top5] sums
    half = nq // 2
    s12 = jnp.sum(per_tile[:half], axis=0)        # query rows 0..B   -> 1to2
    s21 = jnp.sum(per_tile[half:], axis=0)        # query rows B..2B  -> 2to1
    inv_b = jnp.float32(1.0 / B)
    loss_1to2 = s12[0] * inv_b
    loss_2to1 = s21[0] * inv_b
    # TODO(synk): TopKAccuracy metric-name strings were not provided; using
    # standard 'top1'/'top5' names with the module's 'a2b_'/'b2a_' prefixes.
    metrics = {
        'a2b_top1': s12[1] * inv_b, 'a2b_top5': s12[2] * inv_b,
        'b2a_top1': s21[1] * inv_b, 'b2a_top5': s21[2] * inv_b,
    }
    return loss_1to2, loss_2to1, metrics


# ----------------------------- references ------------------------------------

def _reference_matched(zg_1, zg_2, temp):
    """Pure-JAX reference with the same numerics as the kernel (bf16 matmul
    operands, f32 softmax) — mirrors the PyTorch math for tight comparison."""
    B = zg_1.shape[0]
    inv_temp = 1.0 / temp

    def _norm(z):
        z = z.astype(jnp.float32)
        n = jnp.sqrt(jnp.sum(z * z, axis=-1, keepdims=True))
        return z / jnp.maximum(n, jnp.float32(1e-12))

    scale = jnp.float32(inv_temp) ** 0.5
    zb = (jnp.concatenate([_norm(zg_1), _norm(zg_2)], axis=0) * scale
          ).astype(jnp.bfloat16)
    scores = jnp.dot(zb, zb.T, preferred_element_type=jnp.float32)   # (2B, 2B)
    zbf = zb.astype(jnp.float32)
    pos = jnp.sum(zbf[:B] * zbf[B:], axis=-1)                        # (B,)

    idx = jnp.arange(B)
    col = jnp.arange(2 * B)[None, :]
    excl = jnp.logical_or(col == idx[:, None], col == idx[:, None] + B)

    def build(rows):
        neg = jnp.where(excl, -jnp.inf, rows)
        logits = jnp.concatenate([pos[:, None], neg], axis=1)
        loss = jnp.mean(jax.nn.logsumexp(logits, axis=1) - pos)
        greater = jnp.sum(jnp.where(jnp.logical_and(jnp.logical_not(excl),
                                                    rows > pos[:, None]), 1.0, 0.0),
                          axis=1)
        return (loss,
                jnp.mean((greater < 1).astype(jnp.float32)),
                jnp.mean((greater < 5).astype(jnp.float32)))

    return build(scores[:B]), build(scores[B:])


def _reference_f32_loss(zg_1, zg_2, temp):
    """Full-f32 reference (exact PyTorch math) for a loose sanity check."""
    B = zg_1.shape[0]
    z1 = zg_1 / jnp.maximum(jnp.linalg.norm(zg_1, axis=-1, keepdims=True), 1e-12)
    z2 = zg_2 / jnp.maximum(jnp.linalg.norm(zg_2, axis=-1, keepdims=True), 1e-12)
    zb = jnp.concatenate([z1, z2], axis=0)
    scores = (zb @ zb.T) / temp
    pos = jnp.diagonal(scores[:B, B:])
    idx = jnp.arange(B)

    def build(rows):
        s = rows.at[idx, idx].set(-jnp.inf).at[idx, idx + B].set(-jnp.inf)
        logits = jnp.concatenate([pos[:, None], s], axis=1)
        return jnp.mean(jax.nn.logsumexp(logits, axis=1) - pos)

    return build(scores[:B]), build(scores[B:])


if __name__ == "__main__":
    key = jax.random.PRNGKey(0)
    k1, k2 = jax.random.split(key)
    B, d_z = 128, 128                     # small, tile-friendly contrastive batch
    zg_1 = jax.random.normal(k1, (B, d_z), dtype=jnp.float32)
    zg_2 = jax.random.normal(k2, (B, d_z), dtype=jnp.float32)
    temp = 0.1

    results = [
        # default tiles (tq=128, tk=256): static-max path, lane-tiled pos bcast
        global_nce_loss(zg_1, zg_2, similarity_temperature=temp),
        # small tiles: many key tiles per query tile (online reduction, both
        # masked / unmasked branches)
        global_nce_loss(zg_1, zg_2, similarity_temperature=temp,
                        block_q=16, block_k=32),
        # online-max fallback path (forced), same temperature
        global_nce_loss(zg_1, zg_2, similarity_temperature=temp,
                        use_static_max=False),
    ]
    jax.block_until_ready(results)

    (l12_m, a12_1m, a12_5m), (l21_m, a21_1m, a21_5m) = _reference_matched(
        zg_1, zg_2, temp)
    l12_f, l21_f = _reference_f32_loss(zg_1, zg_2, temp)

    acc_tol = 1.5 / B   # top-k accuracy granularity is 1/B; allow a single
                        # near-tie flip from reduction-order / bf16 rounding
    for loss_1to2, loss_2to1, metrics in results:
        assert abs(float(loss_1to2) - float(l12_m)) < 2e-3
        assert abs(float(loss_2to1) - float(l21_m)) < 2e-3
        assert abs(float(metrics['a2b_top1']) - float(a12_1m)) < acc_tol
        assert abs(float(metrics['a2b_top5']) - float(a12_5m)) < acc_tol
        assert abs(float(metrics['b2a_top1']) - float(a21_1m)) < acc_tol
        assert abs(float(metrics['b2a_top5']) - float(a21_5m)) < acc_tol
        # loose sanity vs full-f32 math (bf16 MXU operands drift the loss slightly)
        assert abs(float(loss_1to2) - float(l12_f)) < 5e-2
        assert abs(float(loss_2to1) - float(l21_f)) < 5e-2

    # All tilings / both max-handling paths must agree with each other tightly.
    for r in results[1:]:
        assert abs(float(results[0][0]) - float(r[0])) < 1e-4
        assert abs(float(results[0][1]) - float(r[1])) < 1e-4

    print("KERNEL_OK")
</pallas_src>

<mosaic_0001>
module attributes {stable_mosaic.version = 11 : i64} {
  func.func @_nce_tile_kernel(%arg0: i32, %arg1: i32, %arg2: memref<128x128xbf16, #tpu.memory_space<vmem>>, %arg3: memref<128x128xf32, #tpu.memory_space<vmem>>, %arg4: memref<256x128xbf16, #tpu.memory_space<vmem>>, %arg5: memref<1x8x128xf32, #tpu.memory_space<vmem>>, %arg6: memref<128x128xf32, #tpu.memory_space<vmem>>, %arg7: memref<128x128xf32, #tpu.memory_space<vmem>>, %arg8: memref<128x128xf32, #tpu.memory_space<vmem>>) attributes {dimension_semantics = [#tpu.dimension_semantics<parallel>, #tpu.dimension_semantics<arbitrary>], iteration_bounds = array<i64: 2, 1>, scalar_prefetch = 0 : i64, scratch_operands = 3 : i64, tpu.core_type = #tpu.core_type<tc>, window_params = [{transform_indices = @transform_0, window_bounds = array<i64: 128, 128>}, {transform_indices = @transform_1, window_bounds = array<i64: 128, 128>}, {transform_indices = @transform_2, window_bounds = array<i64: 256, 128>}, {transform_indices = @transform_3, window_bounds = array<i64: 1, 8, 128>}]} {
    %c128_i32 = arith.constant 128 : i32
    %0 = arith.muli %arg0, %c128_i32 : i32
    %c128_i32_0 = arith.constant 128 : i32
    %c0_i32 = arith.constant 0 : i32
    %1 = arith.cmpi eq, %c128_i32_0, %c0_i32 : i32
    %c1_i32 = arith.constant 1 : i32
    %2 = arith.select %1, %c1_i32, %c128_i32_0 : i32
    %3 = arith.remsi %0, %2 : i32
    %c0_i32_1 = arith.constant 0 : i32
    %4 = arith.cmpi ne, %3, %c0_i32_1 : i32
    %c0_i32_2 = arith.constant 0 : i32
    %5 = arith.cmpi slt, %3, %c0_i32_2 : i32
    %c0_i32_3 = arith.constant 0 : i32
    %6 = arith.cmpi slt, %2, %c0_i32_3 : i32
    %7 = arith.xori %5, %6 : i1
    %8 = arith.andi %7, %4 : i1
    %9 = arith.addi %3, %2 : i32
    %10 = arith.select %8, %9, %3 : i32
    %c256_i32 = arith.constant 256 : i32
    %11 = arith.muli %arg1, %c256_i32 : i32
    %12 = arith.subi %10, %11 : i32
    %c128_i32_4 = arith.constant 128 : i32
    %13 = arith.addi %10, %c128_i32_4 : i32
    %14 = arith.subi %13, %11 : i32
    %c0_i32_5 = arith.constant 0 : i32
    %15 = arith.cmpi eq, %arg1, %c0_i32_5 : i32
    %16 = arith.extui %15 : i1 to i32
    %c0_i32_6 = arith.constant 0 : i32
    %17 = arith.cmpi ne, %16, %c0_i32_6 : i32
    scf.if %17 {
      %c0_19 = arith.constant 0 : index
      %c0_20 = arith.constant 0 : index
      %38 = vector.load %arg3[%c0_19, %c0_20] : memref<128x128xf32, #tpu.memory_space<vmem>>, vector<128x128xf32>
      %cst_21 = arith.constant 1.000000e+01 : f32
      %39 = vector.broadcast %cst_21 : f32 to vector<128x128xf32>
      %40 = arith.subf %38, %39 : vector<128x128xf32>
      %41 = math.exp %40 : vector<128x128xf32>
      %c0_22 = arith.constant 0 : index
      %c0_23 = arith.constant 0 : index
      %42 = vector.load %arg7[%c0_22, %c0_23] : memref<128x128xf32, #tpu.memory_space<vmem>>, vector<128x128xf32>
      tpu.vector_store %arg7[%c0_22, %c0_23], %41 {strides = array<i32>} : memref<128x128xf32, #tpu.memory_space<vmem>>, vector<128x128xf32>,
      %cst_24 = arith.constant 0.000000e+00 : f32
      %43 = vector.broadcast %cst_24 : f32 to vector<128x128xf32>
      %c0_25 = arith.constant 0 : index
      %c0_26 = arith.constant 0 : index
      %44 = vector.load %arg8[%c0_25, %c0_26] : memref<128x128xf32, #tpu.memory_space<vmem>>, vector<128x128xf32>
      tpu.vector_store %arg8[%c0_25, %c0_26], %43 {strides = array<i32>} : memref<128x128xf32, #tpu.memory_space<vmem>>, vector<128x128xf32>,
    } else {
    }
    %c0 = arith.constant 0 : index
    %c0_7 = arith.constant 0 : index
    %18 = vector.load %arg2[%c0, %c0_7] : memref<128x128xbf16, #tpu.memory_space<vmem>>, vector<128x128xbf16>
    %c0_8 = arith.constant 0 : index
    %c0_9 = arith.constant 0 : index
    %19 = vector.load %arg4[%c0_8, %c0_9] : memref<256x128xbf16, #tpu.memory_space<vmem>>, vector<256x128xbf16>
    %cst = arith.constant dense<0.000000e+00> : vector<128x256xf32>
    %20 = tpu.matmul %18, %19, %cst {dimension_numbers = #tpu.dot_dimension_numbers<[1], [1], [0], [0], [0, 0, 1, 0], [], []>} : vector<128x128xbf16>, vector<256x128xbf16>, vector<128x256xf32> -> vector<128x256xf32>
    %c0_10 = arith.constant 0 : index
    %c0_11 = arith.constant 0 : index
    %21 = vector.load %arg3[%c0_10, %c0_11] : memref<128x128xf32, #tpu.memory_space<vmem>>, vector<128x128xf32>
    %22 = tpu.concatenate %21, %21 in 1 : vector<128x128xf32>, vector<128x128xf32> -> vector<128x256xf32>
    %c-128_i32 = arith.constant -128 : i32
    %23 = arith.cmpi sgt, %12, %c-128_i32 : i32
    %c256_i32_12 = arith.constant 256 : i32
    %24 = arith.cmpi slt, %12, %c256_i32_12 : i32
    %25 = arith.andi %23, %24 : i1
    %c-128_i32_13 = arith.constant -128 : i32
    %26 = arith.cmpi sgt, %14, %c-128_i32_13 : i32
    %c256_i32_14 = arith.constant 256 : i32
    %27 = arith.cmpi slt, %14, %c256_i32_14 : i32
    %28 = arith.andi %26, %27 : i1
    %29 = arith.ori %25, %28 : i1
    %30 = arith.extui %29 : i1 to i32
    %c0_i32_15 = arith.constant 0 : i32
    %31 = arith.cmpi ne, %30, %c0_i32_15 : i32
    scf.if %31 {
      %38 = tpu.iota {dimensions = array<i32: 0>} : vector<128x256xi32>
      %39 = tpu.iota {dimensions = array<i32: 1>} : vector<128x256xi32>
      %40 = arith.subi %39, %38 : vector<128x256xi32>
      %41 = vector.broadcast %12 : i32 to vector<128x256xi32>
      %42 = arith.cmpi eq, %40, %41 : vector<128x256xi32>
      %43 = vector.broadcast %14 : i32 to vector<128x256xi32>
      %44 = arith.cmpi eq, %40, %43 : vector<128x256xi32>
      %45 = arith.ori %42, %44 : vector<128x256xi1>
      %cst_19 = arith.constant dense<true> : vector<128x256xi1>
      %46 = arith.xori %45, %cst_19 : vector<128x256xi1>
      %cst_20 = arith.constant 1.000000e+01 : f32
      %47 = vector.broadcast %cst_20 : f32 to vector<128x256xf32>
      %48 = arith.subf %20, %47 : vector<128x256xf32>
      %49 = math.exp %48 : vector<128x256xf32>
      %cst_21 = arith.constant 0.000000e+00 : f32
      %50 = vector.broadcast %cst_21 : f32 to vector<128x256xf32>
      %51 = arith.select %46, %49, %50 : vector<128x256xi1>, vector<128x256xf32>
      %c0_22 = arith.constant 0 : index
      %c0_23 = arith.constant 0 : index
      %52 = vector.load %arg7[%c0_22, %c0_23] : memref<128x128xf32, #tpu.memory_space<vmem>>, vector<128x128xf32>
      %cst_24 = arith.constant dense<0.000000e+00> : vector<128xf32>
      %53 = vector.multi_reduction <add>, %51, %cst_24 [1] : vector<128x256xf32> to vector<128xf32>
      %54 = vector.shape_cast %53 : vector<128xf32> to vector<128x1xf32>
      %55 = vector.broadcast %54 : vector<128x1xf32> to vector<128x128xf32>
      %56 = arith.addf %52, %55 : vector<128x128xf32>
      %c0_25 = arith.constant 0 : index
      %c0_26 = arith.constant 0 : index
      %57 = vector.load %arg7[%c0_25, %c0_26] : memref<128x128xf32, #tpu.memory_space<vmem>>, vector<128x128xf32>
      tpu.vector_store %arg7[%c0_25, %c0_26], %56 {strides = array<i32>} : memref<128x128xf32, #tpu.memory_space<vmem>>, vector<128x128xf32>,
      %58 = arith.cmpf ogt, %20, %22 : vector<128x256xf32>
      %59 = arith.andi %58, %46 : vector<128x256xi1>
      %c0_27 = arith.constant 0 : index
      %c0_28 = arith.constant 0 : index
      %60 = vector.load %arg8[%c0_27, %c0_28] : memref<128x128xf32, #tpu.memory_space<vmem>>, vector<128x128xf32>
      %61 = arith.extui %59 : vector<128x256xi1> to vector<128x256xi32>
      %62 = arith.sitofp %61 : vector<128x256xi32> to vector<128x256xf32>
      %cst_29 = arith.constant dense<0.000000e+00> : vector<128xf32>
      %63 = vector.multi_reduction <add>, %62, %cst_29 [1] : vector<128x256xf32> to vector<128xf32>
      %64 = vector.shape_cast %63 : vector<128xf32> to vector<128x1xf32>
      %65 = vector.broadcast %64 : vector<128x1xf32> to vector<128x128xf32>
      %66 = arith.addf %60, %65 : vector<128x128xf32>
      %c0_30 = arith.constant 0 : index
      %c0_31 = arith.constant 0 : index
      %67 = vector.load %arg8[%c0_30, %c0_31] : memref<128x128xf32, #tpu.memory_space<vmem>>, vector<128x128xf32>
      tpu.vector_store %arg8[%c0_30, %c0_31], %66 {strides = array<i32>} : memref<128x128xf32, #tpu.memory_space<vmem>>, vector<128x128xf32>,
    } else {
    }
    %true = arith.constant true
    %32 = arith.xori %29, %true : i1
    %33 = arith.extui %32 : i1 to i32
    %c0_i32_16 = arith.constant 0 : i32
    %34 = arith.cmpi ne, %33, %c0_i32_16 : i32
    scf.if %34 {
      %cst_19 = arith.constant 1.000000e+01 : f32
      %38 = vector.broadcast %cst_19 : f32 to vector<128x256xf32>
      %39 = arith.subf %20, %38 : vector<128x256xf32>
      %40 = math.exp %39 : vector<128x256xf32>
      %c0_20 = arith.constant 0 : index
      %c0_21 = arith.constant 0 : index
      %41 = vector.load %arg7[%c0_20, %c0_21] : memref<128x128xf32, #tpu.memory_space<vmem>>, vector<128x128xf32>
      %cst_22 = arith.constant dense<0.000000e+00> : vector<128xf32>
      %42 = vector.multi_reduction <add>, %40, %cst_22 [1] : vector<128x256xf32> to vector<128xf32>
      %43 = vector.shape_cast %42 : vector<128xf32> to vector<128x1xf32>
      %44 = vector.broadcast %43 : vector<128x1xf32> to vector<128x128xf32>
      %45 = arith.addf %41, %44 : vector<128x128xf32>
      %c0_23 = arith.constant 0 : index
      %c0_24 = arith.constant 0 : index
      %46 = vector.load %arg7[%c0_23, %c0_24] : memref<128x128xf32, #tpu.memory_space<vmem>>, vector<128x128xf32>
      tpu.vector_store %arg7[%c0_23, %c0_24], %45 {strides = array<i32>} : memref<128x128xf32, #tpu.memory_space<vmem>>, vector<128x128xf32>,
      %47 = arith.cmpf ogt, %20, %22 : vector<128x256xf32>
      %c0_25 = arith.constant 0 : index
      %c0_26 = arith.constant 0 : index
      %48 = vector.load %arg8[%c0_25, %c0_26] : memref<128x128xf32, #tpu.memory_space<vmem>>, vector<128x128xf32>
      %49 = arith.extui %47 : vector<128x256xi1> to vector<128x256xi32>
      %50 = arith.sitofp %49 : vector<128x256xi32> to vector<128x256xf32>
      %cst_27 = arith.constant dense<0.000000e+00> : vector<128xf32>
      %51 = vector.multi_reduction <add>, %50, %cst_27 [1] : vector<128x256xf32> to vector<128xf32>
      %52 = vector.shape_cast %51 : vector<128xf32> to vector<128x1xf32>
      %53 = vector.broadcast %52 : vector<128x1xf32> to vector<128x128xf32>
      %54 = arith.addf %48, %53 : vector<128x128xf32>
      %c0_28 = arith.constant 0 : index
      %c0_29 = arith.constant 0 : index
      %55 = vector.load %arg8[%c0_28, %c0_29] : memref<128x128xf32, #tpu.memory_space<vmem>>, vector<128x128xf32>
      tpu.vector_store %arg8[%c0_28, %c0_29], %54 {strides = array<i32>} : memref<128x128xf32, #tpu.memory_space<vmem>>, vector<128x128xf32>,
    } else {
    }
    %c0_i32_17 = arith.constant 0 : i32
    %35 = arith.cmpi eq, %arg1, %c0_i32_17 : i32
    %36 = arith.extui %35 : i1 to i32
    %c0_i32_18 = arith.constant 0 : i32
    %37 = arith.cmpi ne, %36, %c0_i32_18 : i32
    scf.if %37 {
      %c0_19 = arith.constant 0 : index
      %c0_20 = arith.constant 0 : index
      %38 = vector.load %arg7[%c0_19, %c0_20] : memref<128x128xf32, #tpu.memory_space<vmem>>, vector<128x128xf32>
      %39 = vector.extract_strided_slice %38 {offsets = [0, 0], sizes = [128, 1], strides = [1, 1]} : vector<128x128xf32> to vector<128x1xf32>
      %c0_21 = arith.constant 0 : index
      %c0_22 = arith.constant 0 : index
      %40 = vector.load %arg8[%c0_21, %c0_22] : memref<128x128xf32, #tpu.memory_space<vmem>>, vector<128x128xf32>
      %41 = vector.extract_strided_slice %40 {offsets = [0, 0], sizes = [128, 1], strides = [1, 1]} : vector<128x128xf32> to vector<128x1xf32>
      %c0_23 = arith.constant 0 : index
      %c0_24 = arith.constant 0 : index
      %42 = vector.load %arg3[%c0_23, %c0_24] : memref<128x128xf32, #tpu.memory_space<vmem>>, vector<128x128xf32>
      %43 = vector.extract_strided_slice %42 {offsets = [0, 0], sizes = [128, 1], strides = [1, 1]} : vector<128x128xf32> to vector<128x1xf32>
      %44 = math.log %39 : vector<128x1xf32>
      %cst_25 = arith.constant 1.000000e+01 : f32
      %45 = vector.broadcast %cst_25 : f32 to vector<128x1xf32>
      %46 = arith.addf %45, %44 : vector<128x1xf32>
      %47 = arith.subf %46, %43 : vector<128x1xf32>
      %48 = vector.shape_cast %47 : vector<128x1xf32> to vector<1x128x1xf32>
      %cst_26 = arith.constant dense<0.000000e+00> : vector<1xf32>
      %49 = vector.multi_reduction <add>, %48, %cst_26 [1, 2] : vector<1x128x1xf32> to vector<1xf32>
      %50 = vector.shape_cast %49 : vector<1xf32> to vector<1x1x1xf32>
      %51 = vector.extract %50[0, 0, 0] : f32 from vector<1x1x1xf32>
      %cst_27 = arith.constant 1.000000e+00 : f32
      %52 = vector.broadcast %cst_27 : f32 to vector<128x1xf32>
      %53 = arith.cmpf olt, %41, %52 : vector<128x1xf32>
      %54 = arith.extui %53 : vector<128x1xi1> to vector<128x1xi32>
      %55 = arith.sitofp %54 : vector<128x1xi32> to vector<128x1xf32>
      %56 = vector.shape_cast %55 : vector<128x1xf32> to vector<1x128x1xf32>
      %cst_28 = arith.constant dense<0.000000e+00> : vector<1xf32>
      %57 = vector.multi_reduction <add>, %56, %cst_28 [1, 2] : vector<1x128x1xf32> to vector<1xf32>
      %58 = vector.shape_cast %57 : vector<1xf32> to vector<1x1x1xf32>
      %59 = vector.extract %58[0, 0, 0] : f32 from vector<1x1x1xf32>
      %cst_29 = arith.constant 5.000000e+00 : f32
      %60 = vector.broadcast %cst_29 : f32 to vector<128x1xf32>
      %61 = arith.cmpf olt, %41, %60 : vector<128x1xf32>
      %62 = arith.extui %61 : vector<128x1xi1> to vector<128x1xi32>
      %63 = arith.sitofp %62 : vector<128x1xi32> to vector<128x1xf32>
      %64 = vector.shape_cast %63 : vector<128x1xf32> to vector<1x128x1xf32>
      %cst_30 = arith.constant dense<0.000000e+00> : vector<1xf32>
      %65 = vector.multi_reduction <add>, %64, %cst_30 [1, 2] : vector<1x128x1xf32> to vector<1xf32>
      %66 = vector.shape_cast %65 : vector<1xf32> to vector<1x1x1xf32>
      %67 = vector.extract %66[0, 0, 0] : f32 from vector<1x1x1xf32>
      %68 = tpu.iota {dimensions = array<i32: 0>} : vector<8x128xi32>
      %c0_i32_31 = arith.constant 0 : i32
      %69 = vector.broadcast %c0_i32_31 : i32 to vector<8x128xi32>
      %70 = arith.cmpi eq, %68, %69 : vector<8x128xi32>
      %c1_i32_32 = arith.constant 1 : i32
      %71 = vector.broadcast %c1_i32_32 : i32 to vector<8x128xi32>
      %72 = arith.cmpi eq, %68, %71 : vector<8x128xi32>
      %c2_i32 = arith.constant 2 : i32
      %73 = vector.broadcast %c2_i32 : i32 to vector<8x128xi32>
      %74 = arith.cmpi eq, %68, %73 : vector<8x128xi32>
      %cst_33 = arith.constant 0.000000e+00 : f32
      %75 = vector.broadcast %67 : f32 to vector<8x128xf32>
      %76 = vector.broadcast %cst_33 : f32 to vector<8x128xf32>
      %77 = arith.select %74, %75, %76 : vector<8x128xi1>, vector<8x128xf32>
      %78 = vector.broadcast %59 : f32 to vector<8x128xf32>
      %79 = arith.select %72, %78, %77 : vector<8x128xi1>, vector<8x128xf32>
      %80 = vector.broadcast %51 : f32 to vector<8x128xf32>
      %81 = arith.select %70, %80, %79 : vector<8x128xi1>, vector<8x128xf32>
      %82 = vector.shape_cast %81 : vector<8x128xf32> to vector<1x8x128xf32>
      %c0_34 = arith.constant 0 : index
      %c0_35 = arith.constant 0 : index
      %c0_36 = arith.constant 0 : index
      %83 = vector.load %arg5[%c0_34, %c0_35, %c0_36] : memref<1x8x128xf32, #tpu.memory_space<vmem>>, vector<1x8x128xf32>
      tpu.vector_store %arg5[%c0_34, %c0_35, %c0_36], %82 {strides = array<i32>} : memref<1x8x128xf32, #tpu.memory_space<vmem>>, vector<1x8x128xf32>,
    } else {
    }
    return
  }
  func.func @transform_0(%arg0: i32, %arg1: i32) -> (i32, i32) {
    %c0_i32 = arith.constant 0 : i32
    %c0_i32_0 = arith.constant 0 : i32
    return %arg0, %c0_i32 : i32, i32
  }
  func.func @transform_1(%arg0: i32, %arg1: i32) -> (i32, i32) {
    %c0_i32 = arith.constant 0 : i32
    %c0_i32_0 = arith.constant 0 : i32
    return %arg0, %c0_i32 : i32, i32
  }
  func.func @transform_2(%arg0: i32, %arg1: i32) -> (i32, i32) {
    %c0_i32 = arith.constant 0 : i32
    %c0_i32_0 = arith.constant 0 : i32
    return %arg1, %c0_i32 : i32, i32
  }
  func.func @transform_3(%arg0: i32, %arg1: i32) -> (i32, i32, i32) {
    %c0_i32 = arith.constant 0 : i32
    %c0_i32_0 = arith.constant 0 : i32
    %c0_i32_1 = arith.constant 0 : i32
    return %arg0, %c0_i32, %c0_i32_0 : i32, i32, i32
  }
}

</mosaic_0001>

<llo_original>
// kernel: tpu_custom_call.1
$region0: #{tpu_custom_call.1}
  #allocation0 [shape = 'u32[]', space=smem, size = 0x4, offset = 0x4, fixed_abs, tag = 'smem constant byte address 0x4 - core index']
  #allocation1 [shape = 'u32[144,128]{1,0:T(1,128)}', space=vmem, size = 0x12000, scoped, tag = 'internal scratch']
  #allocation2 [shape = 'f32[128,128]{1,0:T(8,128)}', space=vmem, size = 0x10000, scoped, tag = 'scratch operand']
  #allocation3 [shape = 'f32[128,128]{1,0:T(8,128)}', space=vmem, size = 0x10000, scoped, tag = 'scratch operand']
  #allocation4 [shape = 'f32[128,128]{1,0:T(8,128)}', space=vmem, size = 0x10000, scoped, tag = 'scratch operand']
  %s0 = inlined_call_operand.hbm [shape: bf16[256,128], index: 0, kind: input, shape index: {}]
  %s1 = inlined_call_operand.hbm [shape: f32[256,128], index: 1, kind: input, shape index: {}]
  %s2 = inlined_call_operand.hbm [shape: bf16[256,128], index: 2, kind: input, shape index: {}]
  %s3 = inlined_call_operand.hbm [shape: f32[2,8,128], index: 3, kind: output, shape index: {}]
  %s4 = sld [smem:[#allocation0]]
  $region73: #{tpu_custom_call.1} parent=0
    _
  %s6 = ssub.s32 1, %s4
  %s7 = scalar_select 0, %s6, %s4
  $region1: #{tpu_custom_call.1} parent=0
    #allocation5 [shape = 'u8[65536]{0}', space=vmem, size = 0x10000, scoped, tag = 'input window, operand 0']
    #allocation6 [shape = 's32[2]{0}', space=sflag, size = 0x8, scoped, tag = 'scoped memory for tpu_custom_call.1']
    #allocation7 [shape = 's32[2]{0}', space=sflag, size = 0x8, scoped, tag = 'scoped memory for tpu_custom_call.1']
    #allocation8 [shape = 'u8[131072]{0}', space=vmem, size = 0x20000, scoped, tag = 'input window, operand 1']
    #allocation9 [shape = 's32[2]{0}', space=sflag, size = 0x8, scoped, tag = 'scoped memory for tpu_custom_call.1']
    #allocation10 [shape = 'u8[65536]{0}', space=vmem, size = 0x10000, scoped, tag = 'input window, operand 2, single buffered']
    #allocation11 [shape = 'u8[8192]{0}', space=vmem, size = 0x2000, scoped, tag = 'output window, operand 0']
    %8 = vsyncpa [#allocation6], 0
    %s9 = scalar_lea.sflag [#allocation6], 1
    %10 = vsyncpa %s9, 0
    %11 = vsyncpa [#allocation9], 0
    %s12 = scalar_lea.sflag [#allocation9], 1
    %13 = vsyncpa %s12, 0
    %14 = vsyncpa [#allocation7], 0
    %s15 = scalar_lea.sflag [#allocation7], 1
    %16 = vsyncpa %s15, 0
    loop: start=0, step=1, limit=4
    $region2: #{tpu_custom_call.1} parent=1 // loop_pre_header
      _
    $region3: #{tpu_custom_call.1} parent=1 // loop_header
      %s18 = sphi 0, %s22
      %p19 = scmp.ge.s32.totalorder %s18, 4
      %s25 = sphi 0, %s37
      %s26 = sphi 0, %s33
      %s27 = sphi 0, %s25
      %s28 = sphi 0, %s26
      %s29 = sphi 0, %s27
      %s30 = sphi 0, %s28
      %s40 = sphi 0, %s42
      %s43 = sphi 0, %s40
      %s44 = sphi 0, %s43
      %s60 = sphi 0, %s44
      %s66 = sphi 0, %s68
      %s69 = sphi 0, %s66
      %s70 = sphi 0, %s69
      %s86 = sphi 0, %s70
      %s92 = sphi 0, %s94
      %s95 = sphi 0, %s92
      %s96 = sphi 0, %s95
      %s112 = sphi 0, %s96
      %s118 = sphi 0, %s120
      %s121 = sphi 0, %s118
      %s122 = sphi 0, %s121
      %s138 = sphi 0, %s122
    $region4: #{tpu_custom_call.1} parent=1 // loop_header_branch
      %21 = sbr.rel (%p19) target = $region8
    $region5: #{tpu_custom_call.1} parent=1 // loop_body
      %s23 = ssub.s32 %s18, 1
      %s24 = ssub.s32 %s18, 2
      %s31 = sadd.s32 1, %s26
      %p32 = scmp.ge.s32.totalorder %s31, 1
      %s33 = scalar_select %p32, 0, %s31
      %s34 = sadd.s32 1, %s25
      %s35 = scalar_select %p32, %s34, %s25
      %p36 = scmp.ge.s32.totalorder %s35, 2
      %s37 = scalar_select %p36, 0, %s35
      %s38 = ssub.s32 %s25, %s37
      %p39 = scmp.eq.s32.totalorder %s38, 0
      %s41 = sadd.s32 %s40, 1
      %s42 = scalar_select %p39, %s40, %s41
      %p45 = pneg %p39
      %p46 = scmp.eq.s32.totalorder %s18, 1
      %p47 = por %p45, %p46
      %p48 = scmp.ne.s32.totalorder %s40, %s43
      %p49 = scmp.eq.s32.totalorder %s18, 0
      %p50 = por %p48, %p49
      %p51 = scmp.ne.s32.totalorder %s40, %s43
      %p52 = scmp.eq.s32.totalorder %s23, 1
      %p53 = por %p51, %p52
      %p54 = scmp.ne.s32.totalorder %s43, %s44
      %p55 = scmp.eq.s32.totalorder %s23, 0
      %p56 = por %p54, %p55
      %p57 = scmp.ne.s32.totalorder %s43, %s44
      %p58 = scmp.eq.s32.totalorder %s24, 1
      %p59 = por %p57, %p58
      %p61 = scmp.ne.s32.totalorder %s44, %s60
      %p62 = scmp.eq.s32.totalorder %s24, 0
      %p63 = por %p61, %p62
      %s64 = ssub.s32 %s25, %s37
      %p65 = scmp.eq.s32.totalorder %s64, 0
      %s67 = sadd.s32 %s66, 1
      %s68 = scalar_select %p65, %s66, %s67
      %p71 = pneg %p65
      %p72 = scmp.eq.s32.totalorder %s18, 1
      %p73 = por %p71, %p72
      %p74 = scmp.ne.s32.totalorder %s66, %s69
      %p75 = scmp.eq.s32.totalorder %s18, 0
      %p76 = por %p74, %p75
      %p77 = scmp.ne.s32.totalorder %s66, %s69
      %p78 = scmp.eq.s32.totalorder %s23, 1
      %p79 = por %p77, %p78
      %p80 = scmp.ne.s32.totalorder %s69, %s70
      %p81 = scmp.eq.s32.totalorder %s23, 0
      %p82 = por %p80, %p81
      %p83 = scmp.ne.s32.totalorder %s69, %s70
      %p84 = scmp.eq.s32.totalorder %s24, 1
      %p85 = por %p83, %p84
      %p87 = scmp.ne.s32.totalorder %s70, %s86
      %p88 = scmp.eq.s32.totalorder %s24, 0
      %p89 = por %p87, %p88
      %s90 = ssub.s32 %s26, %s33
      %p91 = scmp.eq.s32.totalorder %s90, 0
      %s93 = sadd.s32 %s92, 1
      %s94 = scalar_select %p91, %s92, %s93
      %p97 = pneg %p91
      %p98 = scmp.eq.s32.totalorder %s18, 1
      %p99 = por %p97, %p98
      %p100 = scmp.ne.s32.totalorder %s92, %s95
      %p101 = scmp.eq.s32.totalorder %s18, 0
      %p102 = por %p100, %p101
      %p103 = scmp.ne.s32.totalorder %s92, %s95
      %p104 = scmp.eq.s32.totalorder %s23, 1
      %p105 = por %p103, %p104
      %p106 = scmp.ne.s32.totalorder %s95, %s96
      %p107 = scmp.eq.s32.totalorder %s23, 0
      %p108 = por %p106, %p107
      %p109 = scmp.ne.s32.totalorder %s95, %s96
      %p110 = scmp.eq.s32.totalorder %s24, 1
      %p111 = por %p109, %p110
      %p113 = scmp.ne.s32.totalorder %s96, %s112
      %p114 = scmp.eq.s32.totalorder %s24, 0
      %p115 = por %p113, %p114
      %s116 = ssub.s32 %s25, %s37
      %p117 = scmp.eq.s32.totalorder %s116, 0
      %s119 = sadd.s32 %s118, 1
      %s120 = scalar_select %p117, %s118, %s119
      %p123 = pneg %p117
      %p124 = scmp.eq.s32.totalorder %s18, 1
      %p125 = por %p123, %p124
      %p126 = scmp.ne.s32.totalorder %s118, %s121
      %p127 = scmp.eq.s32.totalorder %s18, 0
      %p128 = por %p126, %p127
      %p129 = scmp.ne.s32.totalorder %s118, %s121
      %p130 = scmp.eq.s32.totalorder %s23, 1
      %p131 = por %p129, %p130
      %p132 = scmp.ne.s32.totalorder %s121, %s122
      %p133 = scmp.eq.s32.totalorder %s23, 0
      %p134 = por %p132, %p133
      %p135 = scmp.ne.s32.totalorder %s121, %s122
      %p136 = scmp.eq.s32.totalorder %s24, 1
      %p137 = por %p135, %p136
      %p139 = scmp.ne.s32.totalorder %s122, %s138
      %p140 = scmp.eq.s32.totalorder %s24, 0
      %p141 = por %p139, %p140
      %p142 = scmp.le.s32.totalorder 1, %s18
      %p143 = scmp.lt.s32.totalorder %s18, 3
      %p144 = pnand %p142, %p143
      %p145 = pneg %p144
      // Predicated region
      $region9: #{tpu_custom_call.1} parent=5 // pred_check
        _
      $region10: #{tpu_custom_call.1} parent=5 // pred_check_branch
        %147 = sbr.rel (%p144) target = $region12
      $region11: #{tpu_custom_call.1} parent=5 // pred_region
        %s148 = ssub.s32 %s18, 1
        // Predicated region
        $region13: #{tpu_custom_call.1} parent=11 // pred_check
          %p149 = pneg %p108
        $region14: #{tpu_custom_call.1} parent=11 // pred_check_branch
          %151 = sbr.rel (%p149) target = $region16
        $region15: #{tpu_custom_call.1} parent=11 // pred_region
          %s152 = smul.u32 32, %s28
          %s154 = ssub.s32 2048, 2048
          %155 = vsyncadd [#allocation9], %s154
          %s156 = smul.addr %s152, 64
          %s157 = scalar_lea.hbm %s2, %s156
          %s158 = sshll.u32 [#allocation10], 4
          %s159 = int_to_ptr.vmem [resolvable:$true] %s158
          %164 = dma.hbm_to_vmem [thread:$0]  %s157, 2048, %s159, [#allocation9], 64, 64, 4
        $region16: #{tpu_custom_call.1} parent=11 // pred_fallthru
          _
      $region12: #{tpu_custom_call.1} parent=5 // pred_fallthru
        _
      %p165 = scmp.lt.s32.totalorder %s18, 2
      // Predicated region
      $region17: #{tpu_custom_call.1} parent=5 // pred_check
        %p166 = pneg %p165
      $region18: #{tpu_custom_call.1} parent=5 // pred_check_branch
        %168 = sbr.rel (%p166) target = $region20
      $region19: #{tpu_custom_call.1} parent=5 // pred_region
        // Predicated region
        $region21: #{tpu_custom_call.1} parent=19 // pred_check
          %p169 = pneg %p50
        $region22: #{tpu_custom_call.1} parent=19 // pred_check_branch
          %171 = sbr.rel (%p169) target = $region24
        $region23: #{tpu_custom_call.1} parent=19 // pred_region
          %s172 = sand.u32 %s40, 1
          %s173 = scalar_lea.sflag [#allocation6], %s172
          %s174 = sand.u32 %s40, 1
          %s175 = smul.addr %s174, 64
          %s176 = scalar_lea.vmem [#allocation5], %s175
          %s177 = smul.u32 16, %s25
          %s179 = ssub.s32 1024, 1024
          %180 = vsyncadd %s173, %s179
          %s181 = smul.addr %s177, 64
          %s182 = scalar_lea.hbm %s0, %s181
          %s183 = sshll.u32 %s176, 4
          %s184 = int_to_ptr.vmem [resolvable:$true] %s183
          %189 = dma.hbm_to_vmem [thread:$0]  %s182, 1024, %s184, %s173, 64, 64, 4
        $region24: #{tpu_custom_call.1} parent=19 // pred_fallthru
          _
        // Predicated region
        $region25: #{tpu_custom_call.1} parent=19 // pred_check
          %p190 = pneg %p76
        $region26: #{tpu_custom_call.1} parent=19 // pred_check_branch
          %192 = sbr.rel (%p190) target = $region28
        $region27: #{tpu_custom_call.1} parent=19 // pred_region
          %s193 = sand.u32 %s18, 1
          %s194 = scalar_lea.sflag [#allocation9], %s193
          %s195 = sand.u32 %s66, 1
          %s196 = smul.addr %s195, 128
          %s197 = scalar_lea.vmem [#allocation8], %s196
          %s198 = smul.u32 16, %s25
          %s200 = ssub.s32 2048, 2048
          %201 = vsyncadd %s194, %s200
          %s202 = smul.addr %s198, 128
          %s203 = scalar_lea.hbm %s1, %s202
          %s204 = sshll.u32 %s197, 4
          %s205 = int_to_ptr.vmem [resolvable:$true] %s204
          %210 = dma.hbm_to_vmem [thread:$0]  %s203, 2048, %s205, %s194, 128, 128, 8
        $region28: #{tpu_custom_call.1} parent=19 // pred_fallthru
          _
      $region20: #{tpu_custom_call.1} parent=5 // pred_fallthru
        _
      %p211 = scmp.le.s32.totalorder 1, %s18
      %p212 = scmp.lt.s32.totalorder %s18, 3
      %p213 = pnand %p211, %p212
      %p214 = pneg %p213
      // Predicated region
      $region29: #{tpu_custom_call.1} parent=5 // pred_check
        _
      $region30: #{tpu_custom_call.1} parent=5 // pred_check_branch
        %216 = sbr.rel (%p213) target = $region32
      $region31: #{tpu_custom_call.1} parent=5 // pred_region
        %s217 = ssub.s32 %s18, 1
        %s218 = sand.u32 %s43, 1
        %s219 = scalar_lea.sflag [#allocation6], %s218
        %s220 = sand.u32 %s43, 1
        %s221 = smul.addr %s220, 64
        %s222 = scalar_lea.vmem [#allocation5], %s221
        // Predicated region
        $region33: #{tpu_custom_call.1} parent=31 // pred_check
          %p223 = pneg %p56
        $region34: #{tpu_custom_call.1} parent=31 // pred_check_branch
          %225 = sbr.rel (%p223) target = $region36
        $region35: #{tpu_custom_call.1} parent=31 // pred_region
          %226 = dma.done %s219, 1024
        $region36: #{tpu_custom_call.1} parent=31 // pred_fallthru
          _
        %s227 = sand.u32 %s23, 1
        %s228 = scalar_lea.sflag [#allocation9], %s227
        %s229 = sand.u32 %s69, 1
        %s230 = smul.addr %s229, 128
        %s231 = scalar_lea.vmem [#allocation8], %s230
        // Predicated region
        $region37: #{tpu_custom_call.1} parent=31 // pred_check
          %p232 = pneg %p82
        $region38: #{tpu_custom_call.1} parent=31 // pred_check_branch
          %234 = sbr.rel (%p232) target = $region40
        $region39: #{tpu_custom_call.1} parent=31 // pred_region
          %235 = dma.done %s228, 2048
        $region40: #{tpu_custom_call.1} parent=31 // pred_fallthru
          _
        // Predicated region
        $region41: #{tpu_custom_call.1} parent=31 // pred_check
          %p236 = pneg %p108
        $region42: #{tpu_custom_call.1} parent=31 // pred_check_branch
          %238 = sbr.rel (%p236) target = $region44
        $region43: #{tpu_custom_call.1} parent=31 // pred_region
          %239 = dma.done [#allocation9], 2048
        $region44: #{tpu_custom_call.1} parent=31 // pred_fallthru
          _
        %s240 = sand.u32 %s43, 1
        %s241 = scalar_lea.sflag [#allocation6], %s240
        %s242 = sand.u32 %s43, 1
        %s243 = smul.addr %s242, 64
        %s244 = scalar_lea.vmem [#allocation5], %s243
        %p245 = pneg %p56
        %p246 = pneg %p53
        %s247 = sand.u32 %s23, 1
        %s248 = scalar_lea.sflag [#allocation9], %s247
        %s249 = sand.u32 %s69, 1
        %s250 = smul.addr %s249, 128
        %s251 = scalar_lea.vmem [#allocation8], %s250
        %p252 = pneg %p82
        %p253 = pneg %p79
        %p254 = pneg %p108
        %p255 = pneg %p105
        %p256 = pneg %p134
        %p257 = pneg %p131
        %s258 = sand.u32 %s121, 1
        %s259 = scalar_lea.sflag [#allocation7], %s258
        %s260 = sand.u32 %s121, 1
        %s261 = smul.addr %s260, 8
        %s262 = scalar_lea.vmem [#allocation11], %s261
        %s263 = smul.u32 16, %s27
        %s264 = smul.u32 16, %s27
        %s265 = smul.u32 32, %s28
        %s267 = smul.u32 %s27, 128
        %p268 = scmp.lt.s32.totalorder %s267, 0
        %s269 = ssub.s32 0, %s267
        %s270 = scalar_select %p268, %s269, %s267
        %s271 = sand.u32 %s270, 127
        %s272 = ssub.s32 0, %s271
        %s273 = scalar_select %p268, %s272, %s271
        %p274 = scmp.ne.s32.totalorder %s273, 0
        %p275 = scmp.lt.s32.totalorder %s273, 0
        %p276 = pnand %p275, %p274
        %p277 = pneg %p276
        %s278 = sadd.s32 %s273, 128
        %s279 = scalar_select %p277, %s278, %s273
        %s280 = smul.u32 %s28, 256
        %s281 = ssub.s32 %s279, %s280
        %s282 = sadd.s32 %s279, 128
        %s283 = ssub.s32 %s282, %s280
        %p284 = scmp.eq.s32.totalorder %s28, 0
        // Predicated region
        $region45: #{tpu_custom_call.1} parent=31 // pred_check
          %p285 = pneg %p284
        $region46: #{tpu_custom_call.1} parent=31 // pred_check_branch
          %287 = sbr.rel (%p285) target = $region48
        $region47: #{tpu_custom_call.1} parent=31 // pred_region
          %v288 = vld [vmem:[%s231] sm:$0xff]
          %v289 = vld [vmem:[%s231 + $0x8] sm:$0xff]
          %v290 = vld [vmem:[%s231 + $0x10] sm:$0xff]
          %v291 = vld [vmem:[%s231 + $0x18] sm:$0xff]
          %v292 = vld [vmem:[%s231 + $0x20] sm:$0xff]
          %v293 = vld [vmem:[%s231 + $0x28] sm:$0xff]
          %v294 = vld [vmem:[%s231 + $0x30] sm:$0xff]
          %v295 = vld [vmem:[%s231 + $0x38] sm:$0xff]
          %v296 = vld [vmem:[%s231 + $0x40] sm:$0xff]
          %v297 = vld [vmem:[%s231 + $0x48] sm:$0xff]
          %v298 = vld [vmem:[%s231 + $0x50] sm:$0xff]
          %v299 = vld [vmem:[%s231 + $0x58] sm:$0xff]
          %v300 = vld [vmem:[%s231 + $0x60] sm:$0xff]
          %v301 = vld [vmem:[%s231 + $0x68] sm:$0xff]
          %v302 = vld [vmem:[%s231 + $0x70] sm:$0xff]
          %v303 = vld [vmem:[%s231 + $0x78] sm:$0xff]
          %v304 = vsub.f32 %v288, 10.0
          %v305 = vsub.f32 %v289, 10.0
          %v306 = vsub.f32 %v290, 10.0
          %v307 = vsub.f32 %v291, 10.0
          %v308 = vsub.f32 %v292, 10.0
          %v309 = vsub.f32 %v293, 10.0
          %v310 = vsub.f32 %v294, 10.0
          %v311 = vsub.f32 %v295, 10.0
          %v312 = vsub.f32 %v296, 10.0
          %v313 = vsub.f32 %v297, 10.0
          %v314 = vsub.f32 %v298, 10.0
          %v315 = vsub.f32 %v299, 10.0
          %v316 = vsub.f32 %v300, 10.0
          %v317 = vsub.f32 %v301, 10.0
          %v318 = vsub.f32 %v302, 10.0
          %v319 = vsub.f32 %v303, 10.0
          %v320 = vmul.f32 %v304, 1.442695
          %v321 = vpow.pop %v320
          %v322 = vmul.f32 %v305, 1.442695
          %v323 = vpow.pop %v322
          %v324 = vmul.f32 %v306, 1.442695
          %v325 = vpow.pop %v324
          %v326 = vmul.f32 %v307, 1.442695
          %v327 = vpow.pop %v326
          %v328 = vmul.f32 %v308, 1.442695
          %v329 = vpow.pop %v328
          %v330 = vmul.f32 %v309, 1.442695
          %v331 = vpow.pop %v330
          %v332 = vmul.f32 %v310, 1.442695
          %v333 = vpow.pop %v332
          %v334 = vmul.f32 %v311, 1.442695
          %v335 = vpow.pop %v334
          %v336 = vmul.f32 %v312, 1.442695
          %v337 = vpow.pop %v336
          %v338 = vmul.f32 %v313, 1.442695
          %v339 = vpow.pop %v338
          %v340 = vmul.f32 %v314, 1.442695
          %v341 = vpow.pop %v340
          %v342 = vmul.f32 %v315, 1.442695
          %v343 = vpow.pop %v342
          %v344 = vmul.f32 %v316, 1.442695
          %v345 = vpow.pop %v344
          %v346 = vmul.f32 %v317, 1.442695
          %v347 = vpow.pop %v346
          %v348 = vmul.f32 %v318, 1.442695
          %v349 = vpow.pop %v348
          %v350 = vmul.f32 %v319, 1.442695
          %v351 = vpow.pop %v350
          %352 = vst [vmem:[#allocation3] sm:$0xff] %v321
          %353 = vst [vmem:[#allocation3 + $0x8] sm:$0xff] %v323
          %354 = vst [vmem:[#allocation3 + $0x10] sm:$0xff] %v325
          %355 = vst [vmem:[#allocation3 + $0x18] sm:$0xff] %v327
          %356 = vst [vmem:[#allocation3 + $0x20] sm:$0xff] %v329
          %357 = vst [vmem:[#allocation3 + $0x28] sm:$0xff] %v331
          %358 = vst [vmem:[#allocation3 + $0x30] sm:$0xff] %v333
          %359 = vst [vmem:[#allocation3 + $0x38] sm:$0xff] %v335
          %360 = vst [vmem:[#allocation3 + $0x40] sm:$0xff] %v337
          %361 = vst [vmem:[#allocation3 + $0x48] sm:$0xff] %v339
          %362 = vst [vmem:[#allocation3 + $0x50] sm:$0xff] %v341
          %363 = vst [vmem:[#allocation3 + $0x58] sm:$0xff] %v343
          %364 = vst [vmem:[#allocation3 + $0x60] sm:$0xff] %v345
          %365 = vst [vmem:[#allocation3 + $0x68] sm:$0xff] %v347
          %366 = vst [vmem:[#allocation3 + $0x70] sm:$0xff] %v349
          %367 = vst [vmem:[#allocation3 + $0x78] sm:$0xff] %v351
          %368 = vst [vmem:[#allocation4] sm:$0xff] 0.0
          %369 = vst [vmem:[#allocation4 + $0x8] sm:$0xff] 0.0
          %370 = vst [vmem:[#allocation4 + $0x10] sm:$0xff] 0.0
          %371 = vst [vmem:[#allocation4 + $0x18] sm:$0xff] 0.0
          %372 = vst [vmem:[#allocation4 + $0x20] sm:$0xff] 0.0
          %373 = vst [vmem:[#allocation4 + $0x28] sm:$0xff] 0.0
          %374 = vst [vmem:[#allocation4 + $0x30] sm:$0xff] 0.0
          %375 = vst [vmem:[#allocation4 + $0x38] sm:$0xff] 0.0
          %376 = vst [vmem:[#allocation4 + $0x40] sm:$0xff] 0.0
          %377 = vst [vmem:[#allocation4 + $0x48] sm:$0xff] 0.0
          %378 = vst [vmem:[#allocation4 + $0x50] sm:$0xff] 0.0
          %379 = vst [vmem:[#allocation4 + $0x58] sm:$0xff] 0.0
          %380 = vst [vmem:[#allocation4 + $0x60] sm:$0xff] 0.0
          %381 = vst [vmem:[#allocation4 + $0x68] sm:$0xff] 0.0
          %382 = vst [vmem:[#allocation4 + $0x70] sm:$0xff] 0.0
          %383 = vst [vmem:[#allocation4 + $0x78] sm:$0xff] 0.0
        $region48: #{tpu_custom_call.1} parent=31 // pred_fallthru
          _
        %v384 = vld [vmem:[%s222] sm:$0xf]
        %v385 = vld [vmem:[%s222 + $0x4] sm:$0xf]
        %v386 = vld [vmem:[%s222 + $0x8] sm:$0xf]
        %v387 = vld [vmem:[%s222 + $0xc] sm:$0xf]
        %v388 = vld [vmem:[%s222 + $0x10] sm:$0xf]
        %v389 = vld [vmem:[%s222 + $0x14] sm:$0xf]
        %v390 = vld [vmem:[%s222 + $0x18] sm:$0xf]
        %v391 = vld [vmem:[%s222 + $0x1c] sm:$0xf]
        %v392 = vld [vmem:[%s222 + $0x20] sm:$0xf]
        %v393 = vld [vmem:[%s222 + $0x24] sm:$0xf]
        %v394 = vld [vmem:[%s222 + $0x28] sm:$0xf]
        %v395 = vld [vmem:[%s222 + $0x2c] sm:$0xf]
        %v396 = vld [vmem:[%s222 + $0x30] sm:$0xf]
        %v397 = vld [vmem:[%s222 + $0x34] sm:$0xf]
        %v398 = vld [vmem:[%s222 + $0x38] sm:$0xf]
        %v399 = vld [vmem:[%s222 + $0x3c] sm:$0xf]
        %v400 = vld [vmem:[#allocation10] sm:$0xf]
        %v401 = vld [vmem:[#allocation10 + $0x4] sm:$0xf]
        %v402 = vld [vmem:[#allocation10 + $0x8] sm:$0xf]
        %v403 = vld [vmem:[#allocation10 + $0xc] sm:$0xf]
        %v404 = vld [vmem:[#allocation10 + $0x10] sm:$0xf]
        %v405 = vld [vmem:[#allocation10 + $0x14] sm:$0xf]
        %v406 = vld [vmem:[#allocation10 + $0x18] sm:$0xf]
        %v407 = vld [vmem:[#allocation10 + $0x1c] sm:$0xf]
        %v408 = vld [vmem:[#allocation10 + $0x20] sm:$0xf]
        %v409 = vld [vmem:[#allocation10 + $0x24] sm:$0xf]
        %v410 = vld [vmem:[#allocation10 + $0x28] sm:$0xf]
        %v411 = vld [vmem:[#allocation10 + $0x2c] sm:$0xf]
        %v412 = vld [vmem:[#allocation10 + $0x30] sm:$0xf]
        %v413 = vld [vmem:[#allocation10 + $0x34] sm:$0xf]
        %v414 = vld [vmem:[#allocation10 + $0x38] sm:$0xf]
        %v415 = vld [vmem:[#allocation10 + $0x3c] sm:$0xf]
        %v416 = vld [vmem:[#allocation10 + $0x40] sm:$0xf]
        %v417 = vld [vmem:[#allocation10 + $0x44] sm:$0xf]
        %v418 = vld [vmem:[#allocation10 + $0x48] sm:$0xf]
        %v419 = vld [vmem:[#allocation10 + $0x4c] sm:$0xf]
        %v420 = vld [vmem:[#allocation10 + $0x50] sm:$0xf]
        %v421 = vld [vmem:[#allocation10 + $0x54] sm:$0xf]
        %v422 = vld [vmem:[#allocation10 + $0x58] sm:$0xf]
        %v423 = vld [vmem:[#allocation10 + $0x5c] sm:$0xf]
        %v424 = vld [vmem:[#allocation10 + $0x60] sm:$0xf]
        %v425 = vld [vmem:[#allocation10 + $0x64] sm:$0xf]
        %v426 = vld [vmem:[#allocation10 + $0x68] sm:$0xf]
        %v427 = vld [vmem:[#allocation10 + $0x6c] sm:$0xf]
        %v428 = vld [vmem:[#allocation10 + $0x70] sm:$0xf]
        %v429 = vld [vmem:[#allocation10 + $0x74] sm:$0xf]
        %v430 = vld [vmem:[#allocation10 + $0x78] sm:$0xf]
        %v431 = vld [vmem:[#allocation10 + $0x7c] sm:$0xf]
        %v448 = vunpack.c.l.b16 %v384
        %v449 = vunpack.c.l.b16 %v385
        %v450 = vunpack.c.l.b16 %v386
        %v451 = vunpack.c.l.b16 %v387
        %v452 = vunpack.c.l.b16 %v388
        %v453 = vunpack.c.l.b16 %v389
        %v454 = vunpack.c.l.b16 %v390
        %v455 = vunpack.c.l.b16 %v391
        %v456 = vunpack.c.l.b16 %v392
        %v457 = vunpack.c.l.b16 %v393
        %v458 = vunpack.c.l.b16 %v394
        %v459 = vunpack.c.l.b16 %v395
        %v460 = vunpack.c.l.b16 %v396
        %v461 = vunpack.c.l.b16 %v397
        %v462 = vunpack.c.l.b16 %v398
        %v463 = vunpack.c.l.b16 %v399
        %v464 = vpack.c.b16 %v449, %v448
        %v465 = vpack.c.b16 %v451, %v450
        %v466 = vpack.c.b16 %v453, %v452
        %v467 = vpack.c.b16 %v455, %v454
        %v468 = vpack.c.b16 %v457, %v456
        %v469 = vpack.c.b16 %v459, %v458
        %v470 = vpack.c.b16 %v461, %v460
        %v471 = vpack.c.b16 %v463, %v462
        %v512 = vunpack.c.l.b16 %v400
        %v513 = vunpack.c.l.b16 %v401
        %v514 = vunpack.c.l.b16 %v402
        %v515 = vunpack.c.l.b16 %v403
        %v516 = vunpack.c.l.b16 %v404
        %v517 = vunpack.c.l.b16 %v405
        %v518 = vunpack.c.l.b16 %v406
        %v519 = vunpack.c.l.b16 %v407
        %v520 = vunpack.c.l.b16 %v408
        %v521 = vunpack.c.l.b16 %v409
        %v522 = vunpack.c.l.b16 %v410
        %v523 = vunpack.c.l.b16 %v411
        %v524 = vunpack.c.l.b16 %v412
        %v525 = vunpack.c.l.b16 %v413
        %v526 = vunpack.c.l.b16 %v414
        %v527 = vunpack.c.l.b16 %v415
        %v528 = vunpack.c.l.b16 %v416
        %v529 = vunpack.c.l.b16 %v417
        %v530 = vunpack.c.l.b16 %v418
        %v531 = vunpack.c.l.b16 %v419
        %v532 = vunpack.c.l.b16 %v420
        %v533 = vunpack.c.l.b16 %v421
        %v534 = vunpack.c.l.b16 %v422
        %v535 = vunpack.c.l.b16 %v423
        %v536 = vunpack.c.l.b16 %v424
        %v537 = vunpack.c.l.b16 %v425
        %v538 = vunpack.c.l.b16 %v426
        %v539 = vunpack.c.l.b16 %v427
        %v540 = vunpack.c.l.b16 %v428
        %v541 = vunpack.c.l.b16 %v429
        %v542 = vunpack.c.l.b16 %v430
        %v543 = vunpack.c.l.b16 %v431
        %v544 = vpack.c.b16 %v513, %v512
        %v545 = vpack.c.b16 %v515, %v514
        %v546 = vpack.c.b16 %v517, %v516
        %v547 = vpack.c.b16 %v519, %v518
        %v548 = vpack.c.b16 %v521, %v520
        %v549 = vpack.c.b16 %v523, %v522
        %v550 = vpack.c.b16 %v525, %v524
        %v551 = vpack.c.b16 %v527, %v526
        %v552 = vpack.c.b16 %v529, %v528
        %v553 = vpack.c.b16 %v531, %v530
        %v554 = vpack.c.b16 %v533, %v532
        %v555 = vpack.c.b16 %v535, %v534
        %v556 = vpack.c.b16 %v537, %v536
        %v557 = vpack.c.b16 %v539, %v538
        %v558 = vpack.c.b16 %v541, %v540
        %v559 = vpack.c.b16 %v543, %v542
        %576 = vmatprep.subr.bf16.mxu0 0
        %577 = vmatpush1.bf16.xpose.msra.mxu0 %v551
        %578 = vmatprep.subr.bf16.mxu0 0
        %579 = vmatpush1.bf16.xpose.msra.mxu0 %v550
        %580 = vmatprep.subr.bf16.mxu0 0
        %581 = vmatpush1.bf16.xpose.msra.mxu0 %v549
        %582 = vmatprep.subr.bf16.mxu0 0
        %583 = vmatpush1.bf16.xpose.msra.mxu0 %v548
        %584 = vmatprep.subr.bf16.mxu0 0
        %585 = vmatpush1.bf16.xpose.msra.mxu0 %v547
        %586 = vmatprep.subr.bf16.mxu0 0
        %587 = vmatpush1.bf16.xpose.msra.mxu0 %v546
        %588 = vmatprep.subr.bf16.mxu0 0
        %589 = vmatpush1.bf16.xpose.msra.mxu0 %v545
        %590 = vmatprep.subr.bf16.mxu0 0
        %591 = vmatpush1.bf16.xpose.msra.mxu0 %v544
        %592 = vmatprep.subr.bf16.mxu0 0
        %593 = vmatpush2.bf16.xpose.msra.mxu0 %v559
        %594 = vmatprep.subr.bf16.mxu0 0
        %595 = vmatpush2.bf16.xpose.msra.mxu0 %v558
        %596 = vmatprep.subr.bf16.mxu0 0
        %597 = vmatpush2.bf16.xpose.msra.mxu0 %v557
        %598 = vmatprep.subr.bf16.mxu0 0
        %599 = vmatpush2.bf16.xpose.msra.mxu0 %v556
        %600 = vmatprep.subr.bf16.mxu0 0
        %601 = vmatpush2.bf16.xpose.msra.mxu0 %v555
        %602 = vmatprep.subr.bf16.mxu0 0
        %603 = vmatpush2.bf16.xpose.msra.mxu0 %v554
        %604 = vmatprep.subr.bf16.mxu0 0
        %605 = vmatpush2.bf16.xpose.msra.mxu0 %v553
        %606 = vmatprep.subr.bf16.mxu0 0
        %607 = vmatpush2.bf16.xpose.msra.mxu0 %v552
        %608 = vmatprep.mubr.bf16.mxu0 0
        %609 = vmatmul.mubr.bf16.gmra.mxu0 %v464
        %v610 = vpop.f32.mrf.mxu0
        %v611 = vadd.f32 0.0, %v610
        %v612 = vpop.f32.mrf.mxu0
        %v613 = vadd.f32 0.0, %v612
        %v614 = vpop.f32.mrf.mxu0
        %v615 = vadd.f32 0.0, %v614
        %v616 = vpop.f32.mrf.mxu0
        %v617 = vadd.f32 0.0, %v616
        %618 = vmatprep.mubr.bf16.mxu0 0
        %619 = vmatmul.mubr.bf16.gmra.mxu0 %v465
        %v620 = vpop.f32.mrf.mxu0
        %v621 = vadd.f32 0.0, %v620
        %v622 = vpop.f32.mrf.mxu0
        %v623 = vadd.f32 0.0, %v622
        %v624 = vpop.f32.mrf.mxu0
        %v625 = vadd.f32 0.0, %v624
        %v626 = vpop.f32.mrf.mxu0
        %v627 = vadd.f32 0.0, %v626
        %628 = vmatprep.mubr.bf16.mxu0 0
        %629 = vmatmul.mubr.bf16.gmra.mxu0 %v466
        %v630 = vpop.f32.mrf.mxu0
        %v631 = vadd.f32 0.0, %v630
        %v632 = vpop.f32.mrf.mxu0
        %v633 = vadd.f32 0.0, %v632
        %v634 = vpop.f32.mrf.mxu0
        %v635 = vadd.f32 0.0, %v634
        %v636 = vpop.f32.mrf.mxu0
        %v637 = vadd.f32 0.0, %v636
        %638 = vmatprep.mubr.bf16.mxu0 0
        %639 = vmatmul.mubr.bf16.gmra.mxu0 %v467
        %v640 = vpop.f32.mrf.mxu0
        %v641 = vadd.f32 0.0, %v640
        %v642 = vpop.f32.mrf.mxu0
        %v643 = vadd.f32 0.0, %v642
        %v644 = vpop.f32.mrf.mxu0
        %v645 = vadd.f32 0.0, %v644
        %v646 = vpop.f32.mrf.mxu0
        %v647 = vadd.f32 0.0, %v646
        %648 = vmatprep.mubr.bf16.mxu0 0
        %649 = vmatmul.mubr.bf16.gmra.mxu0 %v468
        %v650 = vpop.f32.mrf.mxu0
        %v651 = vadd.f32 0.0, %v650
        %v652 = vpop.f32.mrf.mxu0
        %v653 = vadd.f32 0.0, %v652
        %v654 = vpop.f32.mrf.mxu0
        %v655 = vadd.f32 0.0, %v654
        %v656 = vpop.f32.mrf.mxu0
        %v657 = vadd.f32 0.0, %v656
        %658 = vmatprep.mubr.bf16.mxu0 0
        %659 = vmatmul.mubr.bf16.gmra.mxu0 %v469
        %v660 = vpop.f32.mrf.mxu0
        %v661 = vadd.f32 0.0, %v660
        %v662 = vpop.f32.mrf.mxu0
        %v663 = vadd.f32 0.0, %v662
        %v664 = vpop.f32.mrf.mxu0
        %v665 = vadd.f32 0.0, %v664
        %v666 = vpop.f32.mrf.mxu0
        %v667 = vadd.f32 0.0, %v666
        %668 = vmatprep.mubr.bf16.mxu0 0
        %669 = vmatmul.mubr.bf16.gmra.mxu0 %v470
        %v670 = vpop.f32.mrf.mxu0
        %v671 = vadd.f32 0.0, %v670
        %v672 = vpop.f32.mrf.mxu0
        %v673 = vadd.f32 0.0, %v672
        %v674 = vpop.f32.mrf.mxu0
        %v675 = vadd.f32 0.0, %v674
        %v676 = vpop.f32.mrf.mxu0
        %v677 = vadd.f32 0.0, %v676
        %678 = vmatprep.mubr.bf16.mxu0 0
        %679 = vmatmul.mubr.bf16.gmra.mxu0 %v471
        %v680 = vpop.f32.mrf.mxu0
        %v681 = vadd.f32 0.0, %v680
        %v682 = vpop.f32.mrf.mxu0
        %v683 = vadd.f32 0.0, %v682
        %v684 = vpop.f32.mrf.mxu0
        %v685 = vadd.f32 0.0, %v684
        %v686 = vpop.f32.mrf.mxu0
        %v687 = vadd.f32 0.0, %v686
        %688 = vdwg.mxu0
        %v689 = vld [vmem:[%s231] sm:$0xff]
        %v690 = vld [vmem:[%s231 + $0x8] sm:$0xff]
        %v691 = vld [vmem:[%s231 + $0x10] sm:$0xff]
        %v692 = vld [vmem:[%s231 + $0x18] sm:$0xff]
        %v693 = vld [vmem:[%s231 + $0x20] sm:$0xff]
        %v694 = vld [vmem:[%s231 + $0x28] sm:$0xff]
        %v695 = vld [vmem:[%s231 + $0x30] sm:$0xff]
        %v696 = vld [vmem:[%s231 + $0x38] sm:$0xff]
        %v697 = vld [vmem:[%s231 + $0x40] sm:$0xff]
        %v698 = vld [vmem:[%s231 + $0x48] sm:$0xff]
        %v699 = vld [vmem:[%s231 + $0x50] sm:$0xff]
        %v700 = vld [vmem:[%s231 + $0x58] sm:$0xff]
        %v701 = vld [vmem:[%s231 + $0x60] sm:$0xff]
        %v702 = vld [vmem:[%s231 + $0x68] sm:$0xff]
        %v703 = vld [vmem:[%s231 + $0x70] sm:$0xff]
        %v704 = vld [vmem:[%s231 + $0x78] sm:$0xff]
        %p705 = scmp.gt.s32.totalorder %s281, 4294967168
        %p706 = scmp.lt.s32.totalorder %s281, 256
        %p707 = pnand %p705, %p706
        %p708 = pneg %p707
        %p709 = scmp.gt.s32.totalorder %s283, 4294967168
        %p710 = scmp.lt.s32.totalorder %s283, 256
        %p711 = pnand %p709, %p710
        %p712 = pneg %p711
        %p713 = por %p708, %p712
        // Predicated region
        $region49: #{tpu_custom_call.1} parent=31 // pred_check
          %p714 = pneg %p713
        $region50: #{tpu_custom_call.1} parent=31 // pred_check_branch
          %716 = sbr.rel (%p714) target = $region52
        $region51: #{tpu_custom_call.1} parent=31 // pred_region
          %v717 = vlaneseq
          %v718 = vshrl.u32 %v717, 7
          %v719 = vadd.s32 %v718, 8
          %v720 = vadd.s32 %v718, 16
          %v721 = vadd.s32 %v718, 24
          %v722 = vadd.s32 %v718, 32
          %v723 = vadd.s32 %v718, 40
          %v724 = vadd.s32 %v718, 48
          %v725 = vadd.s32 %v718, 56
          %v726 = vadd.s32 %v718, 64
          %v727 = vadd.s32 %v718, 72
          %v728 = vadd.s32 %v718, 80
          %v729 = vadd.s32 %v718, 88
          %v730 = vadd.s32 %v718, 96
          %v731 = vadd.s32 %v718, 104
          %v732 = vadd.s32 %v718, 112
          %v733 = vadd.s32 %v718, 120
          %v734 = vlaneseq
          %v735 = vand.u32 %v734, 127
          %v736 = vadd.s32 %v735, 128
          %v737 = vsub.s32 %v735, %v718
          %v738 = vsub.s32 %v736, %v718
          %v739 = vsub.s32 %v735, %v719
          %v740 = vsub.s32 %v736, %v719
          %v741 = vsub.s32 %v735, %v720
          %v742 = vsub.s32 %v736, %v720
          %v743 = vsub.s32 %v735, %v721
          %v744 = vsub.s32 %v736, %v721
          %v745 = vsub.s32 %v735, %v722
          %v746 = vsub.s32 %v736, %v722
          %v747 = vsub.s32 %v735, %v723
          %v748 = vsub.s32 %v736, %v723
          %v749 = vsub.s32 %v735, %v724
          %v750 = vsub.s32 %v736, %v724
          %v751 = vsub.s32 %v735, %v725
          %v752 = vsub.s32 %v736, %v725
          %v753 = vsub.s32 %v735, %v726
          %v754 = vsub.s32 %v736, %v726
          %v755 = vsub.s32 %v735, %v727
          %v756 = vsub.s32 %v736, %v727
          %v757 = vsub.s32 %v735, %v728
          %v758 = vsub.s32 %v736, %v728
          %v759 = vsub.s32 %v735, %v729
          %v760 = vsub.s32 %v736, %v729
          %v761 = vsub.s32 %v735, %v730
          %v762 = vsub.s32 %v736, %v730
          %v763 = vsub.s32 %v735, %v731
          %v764 = vsub.s32 %v736, %v731
          %v765 = vsub.s32 %v735, %v732
          %v766 = vsub.s32 %v736, %v732
          %v767 = vsub.s32 %v735, %v733
          %v768 = vsub.s32 %v736, %v733
          %v769 = vstv %s281
          %vm770 = vcmp.eq.s32.totalorder %v737, %v769
          %vm771 = vcmp.eq.s32.totalorder %v738, %v769
          %vm772 = vcmp.eq.s32.totalorder %v739, %v769
          %vm773 = vcmp.eq.s32.totalorder %v740, %v769
          %vm774 = vcmp.eq.s32.totalorder %v741, %v769
          %vm775 = vcmp.eq.s32.totalorder %v742, %v769
          %vm776 = vcmp.eq.s32.totalorder %v743, %v769
          %vm777 = vcmp.eq.s32.totalorder %v744, %v769
          %vm778 = vcmp.eq.s32.totalorder %v745, %v769
          %vm779 = vcmp.eq.s32.totalorder %v746, %v769
          %vm780 = vcmp.eq.s32.totalorder %v747, %v769
          %vm781 = vcmp.eq.s32.totalorder %v748, %v769
          %vm782 = vcmp.eq.s32.totalorder %v749, %v769
          %vm783 = vcmp.eq.s32.totalorder %v750, %v769
          %vm784 = vcmp.eq.s32.totalorder %v751, %v769
          %vm785 = vcmp.eq.s32.totalorder %v752, %v769
          %vm786 = vcmp.eq.s32.totalorder %v753, %v769
          %vm787 = vcmp.eq.s32.totalorder %v754, %v769
          %vm788 = vcmp.eq.s32.totalorder %v755, %v769
          %vm789 = vcmp.eq.s32.totalorder %v756, %v769
          %vm790 = vcmp.eq.s32.totalorder %v757, %v769
          %vm791 = vcmp.eq.s32.totalorder %v758, %v769
          %vm792 = vcmp.eq.s32.totalorder %v759, %v769
          %vm793 = vcmp.eq.s32.totalorder %v760, %v769
          %vm794 = vcmp.eq.s32.totalorder %v761, %v769
          %vm795 = vcmp.eq.s32.totalorder %v762, %v769
          %vm796 = vcmp.eq.s32.totalorder %v763, %v769
          %vm797 = vcmp.eq.s32.totalorder %v764, %v769
          %vm798 = vcmp.eq.s32.totalorder %v765, %v769
          %vm799 = vcmp.eq.s32.totalorder %v766, %v769
          %vm800 = vcmp.eq.s32.totalorder %v767, %v769
          %vm801 = vcmp.eq.s32.totalorder %v768, %v769
          %v802 = vstv %s283
          %vm803 = vcmp.eq.s32.totalorder %v737, %v802
          %vm804 = vcmp.eq.s32.totalorder %v738, %v802
          %vm805 = vcmp.eq.s32.totalorder %v739, %v802
          %vm806 = vcmp.eq.s32.totalorder %v740, %v802
          %vm807 = vcmp.eq.s32.totalorder %v741, %v802
          %vm808 = vcmp.eq.s32.totalorder %v742, %v802
          %vm809 = vcmp.eq.s32.totalorder %v743, %v802
          %vm810 = vcmp.eq.s32.totalorder %v744, %v802
          %vm811 = vcmp.eq.s32.totalorder %v745, %v802
          %vm812 = vcmp.eq.s32.totalorder %v746, %v802
          %vm813 = vcmp.eq.s32.totalorder %v747, %v802
          %vm814 = vcmp.eq.s32.totalorder %v748, %v802
          %vm815 = vcmp.eq.s32.totalorder %v749, %v802
          %vm816 = vcmp.eq.s32.totalorder %v750, %v802
          %vm817 = vcmp.eq.s32.totalorder %v751, %v802
          %vm818 = vcmp.eq.s32.totalorder %v752, %v802
          %vm819 = vcmp.eq.s32.totalorder %v753, %v802
          %vm820 = vcmp.eq.s32.totalorder %v754, %v802
          %vm821 = vcmp.eq.s32.totalorder %v755, %v802
          %vm822 = vcmp.eq.s32.totalorder %v756, %v802
          %vm823 = vcmp.eq.s32.totalorder %v757, %v802
          %vm824 = vcmp.eq.s32.totalorder %v758, %v802
          %vm825 = vcmp.eq.s32.totalorder %v759, %v802
          %vm826 = vcmp.eq.s32.totalorder %v760, %v802
          %vm827 = vcmp.eq.s32.totalorder %v761, %v802
          %vm828 = vcmp.eq.s32.totalorder %v762, %v802
          %vm829 = vcmp.eq.s32.totalorder %v763, %v802
          %vm830 = vcmp.eq.s32.totalorder %v764, %v802
          %vm831 = vcmp.eq.s32.totalorder %v765, %v802
          %vm832 = vcmp.eq.s32.totalorder %v766, %v802
          %vm833 = vcmp.eq.s32.totalorder %v767, %v802
          %vm834 = vcmp.eq.s32.totalorder %v768, %v802
          %vm835 = vmor %vm770, %vm803
          %vm836 = vmor %vm771, %vm804
          %vm837 = vmor %vm772, %vm805
          %vm838 = vmor %vm773, %vm806
          %vm839 = vmor %vm774, %vm807
          %vm840 = vmor %vm775, %vm808
          %vm841 = vmor %vm776, %vm809
          %vm842 = vmor %vm777, %vm810
          %vm843 = vmor %vm778, %vm811
          %vm844 = vmor %vm779, %vm812
          %vm845 = vmor %vm780, %vm813
          %vm846 = vmor %vm781, %vm814
          %vm847 = vmor %vm782, %vm815
          %vm848 = vmor %vm783, %vm816
          %vm849 = vmor %vm784, %vm817
          %vm850 = vmor %vm785, %vm818
          %vm851 = vmor %vm786, %vm819
          %vm852 = vmor %vm787, %vm820
          %vm853 = vmor %vm788, %vm821
          %vm854 = vmor %vm789, %vm822
          %vm855 = vmor %vm790, %vm823
          %vm856 = vmor %vm791, %vm824
          %vm857 = vmor %vm792, %vm825
          %vm858 = vmor %vm793, %vm826
          %vm859 = vmor %vm794, %vm827
          %vm860 = vmor %vm795, %vm828
          %vm861 = vmor %vm796, %vm829
          %vm862 = vmor %vm797, %vm830
          %vm863 = vmor %vm798, %vm831
          %vm864 = vmor %vm799, %vm832
          %vm865 = vmor %vm800, %vm833
          %vm866 = vmor %vm801, %vm834
          %vm867 = vmxor %vm835, 1
          %vm868 = vmxor %vm836, 1
          %vm869 = vmxor %vm837, 1
          %vm870 = vmxor %vm838, 1
          %vm871 = vmxor %vm839, 1
          %vm872 = vmxor %vm840, 1
          %vm873 = vmxor %vm841, 1
          %vm874 = vmxor %vm842, 1
          %vm875 = vmxor %vm843, 1
          %vm876 = vmxor %vm844, 1
          %vm877 = vmxor %vm845, 1
          %vm878 = vmxor %vm846, 1
          %vm879 = vmxor %vm847, 1
          %vm880 = vmxor %vm848, 1
          %vm881 = vmxor %vm849, 1
          %vm882 = vmxor %vm850, 1
          %vm883 = vmxor %vm851, 1
          %vm884 = vmxor %vm852, 1
          %vm885 = vmxor %vm853, 1
          %vm886 = vmxor %vm854, 1
          %vm887 = vmxor %vm855, 1
          %vm888 = vmxor %vm856, 1
          %vm889 = vmxor %vm857, 1
          %vm890 = vmxor %vm858, 1
          %vm891 = vmxor %vm859, 1
          %vm892 = vmxor %vm860, 1
          %vm893 = vmxor %vm861, 1
          %vm894 = vmxor %vm862, 1
          %vm895 = vmxor %vm863, 1
          %vm896 = vmxor %vm864, 1
          %vm897 = vmxor %vm865, 1
          %vm898 = vmxor %vm866, 1
          %v899 = vsub.f32 %v611, 10.0
          %v900 = vsub.f32 %v613, 10.0
          %v901 = vsub.f32 %v615, 10.0
          %v902 = vsub.f32 %v617, 10.0
          %v903 = vsub.f32 %v621, 10.0
          %v904 = vsub.f32 %v623, 10.0
          %v905 = vsub.f32 %v625, 10.0
          %v906 = vsub.f32 %v627, 10.0
          %v907 = vsub.f32 %v631, 10.0
          %v908 = vsub.f32 %v633, 10.0
          %v909 = vsub.f32 %v635, 10.0
          %v910 = vsub.f32 %v637, 10.0
          %v911 = vsub.f32 %v641, 10.0
          %v912 = vsub.f32 %v643, 10.0
          %v913 = vsub.f32 %v645, 10.0
          %v914 = vsub.f32 %v647, 10.0
          %v915 = vsub.f32 %v651, 10.0
          %v916 = vsub.f32 %v653, 10.0
          %v917 = vsub.f32 %v655, 10.0
          %v918 = vsub.f32 %v657, 10.0
          %v919 = vsub.f32 %v661, 10.0
          %v920 = vsub.f32 %v663, 10.0
          %v921 = vsub.f32 %v665, 10.0
          %v922 = vsub.f32 %v667, 10.0
          %v923 = vsub.f32 %v671, 10.0
          %v924 = vsub.f32 %v673, 10.0
          %v925 = vsub.f32 %v675, 10.0
          %v926 = vsub.f32 %v677, 10.0
          %v927 = vsub.f32 %v681, 10.0
          %v928 = vsub.f32 %v683, 10.0
          %v929 = vsub.f32 %v685, 10.0
          %v930 = vsub.f32 %v687, 10.0
          %v931 = vmul.f32 %v899, 1.442695
          %v932 = vpow.pop %v931
          %v933 = vmul.f32 %v900, 1.442695
          %v934 = vpow.pop %v933
          %v935 = vmul.f32 %v901, 1.442695
          %v936 = vpow.pop %v935
          %v937 = vmul.f32 %v902, 1.442695
          %v938 = vpow.pop %v937
          %v939 = vmul.f32 %v903, 1.442695
          %v940 = vpow.pop %v939
          %v941 = vmul.f32 %v904, 1.442695
          %v942 = vpow.pop %v941
          %v943 = vmul.f32 %v905, 1.442695
          %v944 = vpow.pop %v943
          %v945 = vmul.f32 %v906, 1.442695
          %v946 = vpow.pop %v945
          %v947 = vmul.f32 %v907, 1.442695
          %v948 = vpow.pop %v947
          %v949 = vmul.f32 %v908, 1.442695
          %v950 = vpow.pop %v949
          %v951 = vmul.f32 %v909, 1.442695
          %v952 = vpow.pop %v951
          %v953 = vmul.f32 %v910, 1.442695
          %v954 = vpow.pop %v953
          %v955 = vmul.f32 %v911, 1.442695
          %v956 = vpow.pop %v955
          %v957 = vmul.f32 %v912, 1.442695
          %v958 = vpow.pop %v957
          %v959 = vmul.f32 %v913, 1.442695
          %v960 = vpow.pop %v959
          %v961 = vmul.f32 %v914, 1.442695
          %v962 = vpow.pop %v961
          %v963 = vmul.f32 %v915, 1.442695
          %v964 = vpow.pop %v963
          %v965 = vmul.f32 %v916, 1.442695
          %v966 = vpow.pop %v965
          %v967 = vmul.f32 %v917, 1.442695
          %v968 = vpow.pop %v967
          %v969 = vmul.f32 %v918, 1.442695
          %v970 = vpow.pop %v969
          %v971 = vmul.f32 %v919, 1.442695
          %v972 = vpow.pop %v971
          %v973 = vmul.f32 %v920, 1.442695
          %v974 = vpow.pop %v973
          %v975 = vmul.f32 %v921, 1.442695
          %v976 = vpow.pop %v975
          %v977 = vmul.f32 %v922, 1.442695
          %v978 = vpow.pop %v977
          %v979 = vmul.f32 %v923, 1.442695
          %v980 = vpow.pop %v979
          %v981 = vmul.f32 %v924, 1.442695
          %v982 = vpow.pop %v981
          %v983 = vmul.f32 %v925, 1.442695
          %v984 = vpow.pop %v983
          %v985 = vmul.f32 %v926, 1.442695
          %v986 = vpow.pop %v985
          %v987 = vmul.f32 %v927, 1.442695
          %v988 = vpow.pop %v987
          %v989 = vmul.f32 %v928, 1.442695
          %v990 = vpow.pop %v989
          %v991 = vmul.f32 %v929, 1.442695
          %v992 = vpow.pop %v991
          %v993 = vmul.f32 %v930, 1.442695
          %v994 = vpow.pop %v993
          %v995 = vsel %vm867, %v932, 0.0
          %v996 = vsel %vm868, %v934, 0.0
          %v997 = vsel %vm869, %v936, 0.0
          %v998 = vsel %vm870, %v938, 0.0
          %v999 = vsel %vm871, %v940, 0.0
          %v1000 = vsel %vm872, %v942, 0.0
          %v1001 = vsel %vm873, %v944, 0.0
          %v1002 = vsel %vm874, %v946, 0.0
          %v1003 = vsel %vm875, %v948, 0.0
          %v1004 = vsel %vm876, %v950, 0.0
          %v1005 = vsel %vm877, %v952, 0.0
          %v1006 = vsel %vm878, %v954, 0.0
          %v1007 = vsel %vm879, %v956, 0.0
          %v1008 = vsel %vm880, %v958, 0.0
          %v1009 = vsel %vm881, %v960, 0.0
          %v1010 = vsel %vm882, %v962, 0.0
          %v1011 = vsel %vm883, %v964, 0.0
          %v1012 = vsel %vm884, %v966, 0.0
          %v1013 = vsel %vm885, %v968, 0.0
          %v1014 = vsel %vm886, %v970, 0.0
          %v1015 = vsel %vm887, %v972, 0.0
          %v1016 = vsel %vm888, %v974, 0.0
          %v1017 = vsel %vm889, %v976, 0.0
          %v1018 = vsel %vm890, %v978, 0.0
          %v1019 = vsel %vm891, %v980, 0.0
          %v1020 = vsel %vm892, %v982, 0.0
          %v1021 = vsel %vm893, %v984, 0.0
          %v1022 = vsel %vm894, %v986, 0.0
          %v1023 = vsel %vm895, %v988, 0.0
          %v1024 = vsel %vm896, %v990, 0.0
          %v1025 = vsel %vm897, %v992, 0.0
          %v1026 = vsel %vm898, %v994, 0.0
          %v1027 = vld [vmem:[#allocation3] sm:$0xff]
          %v1028 = vld [vmem:[#allocation3 + $0x8] sm:$0xff]
          %v1029 = vld [vmem:[#allocation3 + $0x10] sm:$0xff]
          %v1030 = vld [vmem:[#allocation3 + $0x18] sm:$0xff]
          %v1031 = vld [vmem:[#allocation3 + $0x20] sm:$0xff]
          %v1032 = vld [vmem:[#allocation3 + $0x28] sm:$0xff]
          %v1033 = vld [vmem:[#allocation3 + $0x30] sm:$0xff]
          %v1034 = vld [vmem:[#allocation3 + $0x38] sm:$0xff]
          %v1035 = vld [vmem:[#allocation3 + $0x40] sm:$0xff]
          %v1036 = vld [vmem:[#allocation3 + $0x48] sm:$0xff]
          %v1037 = vld [vmem:[#allocation3 + $0x50] sm:$0xff]
          %v1038 = vld [vmem:[#allocation3 + $0x58] sm:$0xff]
          %v1039 = vld [vmem:[#allocation3 + $0x60] sm:$0xff]
          %v1040 = vld [vmem:[#allocation3 + $0x68] sm:$0xff]
          %v1041 = vld [vmem:[#allocation3 + $0x70] sm:$0xff]
          %v1042 = vld [vmem:[#allocation3 + $0x78] sm:$0xff]
          %v1043 = vadd.f32 %v995, %v996
          %1044 = vadd.xlane.f32.xlu0 %v1043
          %v1045 = vpop.xlane.xlu0 %1044
          %v1046 = vadd.f32 %v997, %v998
          %1047 = vadd.xlane.f32.xlu0 %v1046
          %v1048 = vpop.xlane.xlu0 %1047
          %v1049 = vadd.f32 %v999, %v1000
          %1050 = vadd.xlane.f32.xlu0 %v1049
          %v1051 = vpop.xlane.xlu0 %1050
          %v1052 = vadd.f32 %v1001, %v1002
          %1053 = vadd.xlane.f32.xlu0 %v1052
          %v1054 = vpop.xlane.xlu0 %1053
          %v1055 = vadd.f32 %v1003, %v1004
          %1056 = vadd.xlane.f32.xlu0 %v1055
          %v1057 = vpop.xlane.xlu0 %1056
          %v1058 = vadd.f32 %v1005, %v1006
          %1059 = vadd.xlane.f32.xlu0 %v1058
          %v1060 = vpop.xlane.xlu0 %1059
          %v1061 = vadd.f32 %v1007, %v1008
          %1062 = vadd.xlane.f32.xlu0 %v1061
          %v1063 = vpop.xlane.xlu0 %1062
          %v1064 = vadd.f32 %v1009, %v1010
          %1065 = vadd.xlane.f32.xlu0 %v1064
          %v1066 = vpop.xlane.xlu0 %1065
          %v1067 = vadd.f32 %v1011, %v1012
          %1068 = vadd.xlane.f32.xlu0 %v1067
          %v1069 = vpop.xlane.xlu0 %1068
          %v1070 = vadd.f32 %v1013, %v1014
          %1071 = vadd.xlane.f32.xlu0 %v1070
          %v1072 = vpop.xlane.xlu0 %1071
          %v1073 = vadd.f32 %v1015, %v1016
          %1074 = vadd.xlane.f32.xlu0 %v1073
          %v1075 = vpop.xlane.xlu0 %1074
          %v1076 = vadd.f32 %v1017, %v1018
          %1077 = vadd.xlane.f32.xlu0 %v1076
          %v1078 = vpop.xlane.xlu0 %1077
          %v1079 = vadd.f32 %v1019, %v1020
          %1080 = vadd.xlane.f32.xlu0 %v1079
          %v1081 = vpop.xlane.xlu0 %1080
          %v1082 = vadd.f32 %v1021, %v1022
          %1083 = vadd.xlane.f32.xlu0 %v1082
          %v1084 = vpop.xlane.xlu0 %1083
          %v1085 = vadd.f32 %v1023, %v1024
          %1086 = vadd.xlane.f32.xlu0 %v1085
          %v1087 = vpop.xlane.xlu0 %1086
          %v1088 = vadd.f32 %v1025, %v1026
          %1089 = vadd.xlane.f32.xlu0 %v1088
          %v1090 = vpop.xlane.xlu0 %1089
          %v1091 = vadd.f32 %v1027, %v1045
          %v1092 = vadd.f32 %v1028, %v1048
          %v1093 = vadd.f32 %v1029, %v1051
          %v1094 = vadd.f32 %v1030, %v1054
          %v1095 = vadd.f32 %v1031, %v1057
          %v1096 = vadd.f32 %v1032, %v1060
          %v1097 = vadd.f32 %v1033, %v1063
          %v1098 = vadd.f32 %v1034, %v1066
          %v1099 = vadd.f32 %v1035, %v1069
          %v1100 = vadd.f32 %v1036, %v1072
          %v1101 = vadd.f32 %v1037, %v1075
          %v1102 = vadd.f32 %v1038, %v1078
          %v1103 = vadd.f32 %v1039, %v1081
          %v1104 = vadd.f32 %v1040, %v1084
          %v1105 = vadd.f32 %v1041, %v1087
          %v1106 = vadd.f32 %v1042, %v1090
          %1107 = vst [vmem:[#allocation3] sm:$0xff] %v1091
          %1108 = vst [vmem:[#allocation3 + $0x8] sm:$0xff] %v1092
          %1109 = vst [vmem:[#allocation3 + $0x10] sm:$0xff] %v1093
          %1110 = vst [vmem:[#allocation3 + $0x18] sm:$0xff] %v1094
          %1111 = vst [vmem:[#allocation3 + $0x20] sm:$0xff] %v1095
          %1112 = vst [vmem:[#allocation3 + $0x28] sm:$0xff] %v1096
          %1113 = vst [vmem:[#allocation3 + $0x30] sm:$0xff] %v1097
          %1114 = vst [vmem:[#allocation3 + $0x38] sm:$0xff] %v1098
          %1115 = vst [vmem:[#allocation3 + $0x40] sm:$0xff] %v1099
          %1116 = vst [vmem:[#allocation3 + $0x48] sm:$0xff] %v1100
          %1117 = vst [vmem:[#allocation3 + $0x50] sm:$0xff] %v1101
          %1118 = vst [vmem:[#allocation3 + $0x58] sm:$0xff] %v1102
          %1119 = vst [vmem:[#allocation3 + $0x60] sm:$0xff] %v1103
          %1120 = vst [vmem:[#allocation3 + $0x68] sm:$0xff] %v1104
          %1121 = vst [vmem:[#allocation3 + $0x70] sm:$0xff] %v1105
          %1122 = vst [vmem:[#allocation3 + $0x78] sm:$0xff] %v1106
          %vm1123 = vcmp.gt.f32.partialorder %v611, %v689
          %vm1124 = vcmp.gt.f32.partialorder %v613, %v689
          %vm1125 = vcmp.gt.f32.partialorder %v615, %v690
          %vm1126 = vcmp.gt.f32.partialorder %v617, %v690
          %vm1127 = vcmp.gt.f32.partialorder %v621, %v691
          %vm1128 = vcmp.gt.f32.partialorder %v623, %v691
          %vm1129 = vcmp.gt.f32.partialorder %v625, %v692
          %vm1130 = vcmp.gt.f32.partialorder %v627, %v692
          %vm1131 = vcmp.gt.f32.partialorder %v631, %v693
          %vm1132 = vcmp.gt.f32.partialorder %v633, %v693
          %vm1133 = vcmp.gt.f32.partialorder %v635, %v694
          %vm1134 = vcmp.gt.f32.partialorder %v637, %v694
          %vm1135 = vcmp.gt.f32.partialorder %v641, %v695
          %vm1136 = vcmp.gt.f32.partialorder %v643, %v695
          %vm1137 = vcmp.gt.f32.partialorder %v645, %v696
          %vm1138 = vcmp.gt.f32.partialorder %v647, %v696
          %vm1139 = vcmp.gt.f32.partialorder %v651, %v697
          %vm1140 = vcmp.gt.f32.partialorder %v653, %v697
          %vm1141 = vcmp.gt.f32.partialorder %v655, %v698
          %vm1142 = vcmp.gt.f32.partialorder %v657, %v698
          %vm1143 = vcmp.gt.f32.partialorder %v661, %v699
          %vm1144 = vcmp.gt.f32.partialorder %v663, %v699
          %vm1145 = vcmp.gt.f32.partialorder %v665, %v700
          %vm1146 = vcmp.gt.f32.partialorder %v667, %v700
          %vm1147 = vcmp.gt.f32.partialorder %v671, %v701
          %vm1148 = vcmp.gt.f32.partialorder %v673, %v701
          %vm1149 = vcmp.gt.f32.partialorder %v675, %v702
          %vm1150 = vcmp.gt.f32.partialorder %v677, %v702
          %vm1151 = vcmp.gt.f32.partialorder %v681, %v703
          %vm1152 = vcmp.gt.f32.partialorder %v683, %v703
          %vm1153 = vcmp.gt.f32.partialorder %v685, %v704
          %vm1154 = vcmp.gt.f32.partialorder %v687, %v704
          %vm1155 = vmand %vm1123, %vm867
          %vm1156 = vmand %vm1124, %vm868
          %vm1157 = vmand %vm1125, %vm869
          %vm1158 = vmand %vm1126, %vm870
          %vm1159 = vmand %vm1127, %vm871
          %vm1160 = vmand %vm1128, %vm872
          %vm1161 = vmand %vm1129, %vm873
          %vm1162 = vmand %vm1130, %vm874
          %vm1163 = vmand %vm1131, %vm875
          %vm1164 = vmand %vm1132, %vm876
          %vm1165 = vmand %vm1133, %vm877
          %vm1166 = vmand %vm1134, %vm878
          %vm1167 = vmand %vm1135, %vm879
          %vm1168 = vmand %vm1136, %vm880
          %vm1169 = vmand %vm1137, %vm881
          %vm1170 = vmand %vm1138, %vm882
          %vm1171 = vmand %vm1139, %vm883
          %vm1172 = vmand %vm1140, %vm884
          %vm1173 = vmand %vm1141, %vm885
          %vm1174 = vmand %vm1142, %vm886
          %vm1175 = vmand %vm1143, %vm887
          %vm1176 = vmand %vm1144, %vm888
          %vm1177 = vmand %vm1145, %vm889
          %vm1178 = vmand %vm1146, %vm890
          %vm1179 = vmand %vm1147, %vm891
          %vm1180 = vmand %vm1148, %vm892
          %vm1181 = vmand %vm1149, %vm893
          %vm1182 = vmand %vm1150, %vm894
          %vm1183 = vmand %vm1151, %vm895
          %vm1184 = vmand %vm1152, %vm896
          %vm1185 = vmand %vm1153, %vm897
          %vm1186 = vmand %vm1154, %vm898
          %v1187 = vld [vmem:[#allocation4] sm:$0xff]
          %v1188 = vld [vmem:[#allocation4 + $0x8] sm:$0xff]
          %v1189 = vld [vmem:[#allocation4 + $0x10] sm:$0xff]
          %v1190 = vld [vmem:[#allocation4 + $0x18] sm:$0xff]
          %v1191 = vld [vmem:[#allocation4 + $0x20] sm:$0xff]
          %v1192 = vld [vmem:[#allocation4 + $0x28] sm:$0xff]
          %v1193 = vld [vmem:[#allocation4 + $0x30] sm:$0xff]
          %v1194 = vld [vmem:[#allocation4 + $0x38] sm:$0xff]
          %v1195 = vld [vmem:[#allocation4 + $0x40] sm:$0xff]
          %v1196 = vld [vmem:[#allocation4 + $0x48] sm:$0xff]
          %v1197 = vld [vmem:[#allocation4 + $0x50] sm:$0xff]
          %v1198 = vld [vmem:[#allocation4 + $0x58] sm:$0xff]
          %v1199 = vld [vmem:[#allocation4 + $0x60] sm:$0xff]
          %v1200 = vld [vmem:[#allocation4 + $0x68] sm:$0xff]
          %v1201 = vld [vmem:[#allocation4 + $0x70] sm:$0xff]
          %v1202 = vld [vmem:[#allocation4 + $0x78] sm:$0xff]
          %v1203 = vsel %vm1155, 1, 0
          %v1204 = vsel %vm1156, 1, 0
          %v1205 = vsel %vm1157, 1, 0
          %v1206 = vsel %vm1158, 1, 0
          %v1207 = vsel %vm1159, 1, 0
          %v1208 = vsel %vm1160, 1, 0
          %v1209 = vsel %vm1161, 1, 0
          %v1210 = vsel %vm1162, 1, 0
          %v1211 = vsel %vm1163, 1, 0
          %v1212 = vsel %vm1164, 1, 0
          %v1213 = vsel %vm1165, 1, 0
          %v1214 = vsel %vm1166, 1, 0
          %v1215 = vsel %vm1167, 1, 0
          %v1216 = vsel %vm1168, 1, 0
          %v1217 = vsel %vm1169, 1, 0
          %v1218 = vsel %vm1170, 1, 0
          %v1219 = vsel %vm1171, 1, 0
          %v1220 = vsel %vm1172, 1, 0
          %v1221 = vsel %vm1173, 1, 0
          %v1222 = vsel %vm1174, 1, 0
          %v1223 = vsel %vm1175, 1, 0
          %v1224 = vsel %vm1176, 1, 0
          %v1225 = vsel %vm1177, 1, 0
          %v1226 = vsel %vm1178, 1, 0
          %v1227 = vsel %vm1179, 1, 0
          %v1228 = vsel %vm1180, 1, 0
          %v1229 = vsel %vm1181, 1, 0
          %v1230 = vsel %vm1182, 1, 0
          %v1231 = vsel %vm1183, 1, 0
          %v1232 = vsel %vm1184, 1, 0
          %v1233 = vsel %vm1185, 1, 0
          %v1234 = vsel %vm1186, 1, 0
          %v1235 = vcvt.s32.f32 %v1203
          %v1236 = vcvt.s32.f32 %v1204
          %v1237 = vcvt.s32.f32 %v1205
          %v1238 = vcvt.s32.f32 %v1206
          %v1239 = vcvt.s32.f32 %v1207
          %v1240 = vcvt.s32.f32 %v1208
          %v1241 = vcvt.s32.f32 %v1209
          %v1242 = vcvt.s32.f32 %v1210
          %v1243 = vcvt.s32.f32 %v1211
          %v1244 = vcvt.s32.f32 %v1212
          %v1245 = vcvt.s32.f32 %v1213
          %v1246 = vcvt.s32.f32 %v1214
          %v1247 = vcvt.s32.f32 %v1215
          %v1248 = vcvt.s32.f32 %v1216
          %v1249 = vcvt.s32.f32 %v1217
          %v1250 = vcvt.s32.f32 %v1218
          %v1251 = vcvt.s32.f32 %v1219
          %v1252 = vcvt.s32.f32 %v1220
          %v1253 = vcvt.s32.f32 %v1221
          %v1254 = vcvt.s32.f32 %v1222
          %v1255 = vcvt.s32.f32 %v1223
          %v1256 = vcvt.s32.f32 %v1224
          %v1257 = vcvt.s32.f32 %v1225
          %v1258 = vcvt.s32.f32 %v1226
          %v1259 = vcvt.s32.f32 %v1227
          %v1260 = vcvt.s32.f32 %v1228
          %v1261 = vcvt.s32.f32 %v1229
          %v1262 = vcvt.s32.f32 %v1230
          %v1263 = vcvt.s32.f32 %v1231
          %v1264 = vcvt.s32.f32 %v1232
          %v1265 = vcvt.s32.f32 %v1233
          %v1266 = vcvt.s32.f32 %v1234
          %v1267 = vadd.f32 %v1235, %v1236
          %1268 = vadd.xlane.f32.xlu0 %v1267
          %v1269 = vpop.xlane.xlu0 %1268
          %v1270 = vadd.f32 %v1237, %v1238
          %1271 = vadd.xlane.f32.xlu0 %v1270
          %v1272 = vpop.xlane.xlu0 %1271
          %v1273 = vadd.f32 %v1239, %v1240
          %1274 = vadd.xlane.f32.xlu0 %v1273
          %v1275 = vpop.xlane.xlu0 %1274
          %v1276 = vadd.f32 %v1241, %v1242
          %1277 = vadd.xlane.f32.xlu0 %v1276
          %v1278 = vpop.xlane.xlu0 %1277
          %v1279 = vadd.f32 %v1243, %v1244
          %1280 = vadd.xlane.f32.xlu0 %v1279
          %v1281 = vpop.xlane.xlu0 %1280
          %v1282 = vadd.f32 %v1245, %v1246
          %1283 = vadd.xlane.f32.xlu0 %v1282
          %v1284 = vpop.xlane.xlu0 %1283
          %v1285 = vadd.f32 %v1247, %v1248
          %1286 = vadd.xlane.f32.xlu0 %v1285
          %v1287 = vpop.xlane.xlu0 %1286
          %v1288 = vadd.f32 %v1249, %v1250
          %1289 = vadd.xlane.f32.xlu0 %v1288
          %v1290 = vpop.xlane.xlu0 %1289
          %v1291 = vadd.f32 %v1251, %v1252
          %1292 = vadd.xlane.f32.xlu0 %v1291
          %v1293 = vpop.xlane.xlu0 %1292
          %v1294 = vadd.f32 %v1253, %v1254
          %1295 = vadd.xlane.f32.xlu0 %v1294
          %v1296 = vpop.xlane.xlu0 %1295
          %v1297 = vadd.f32 %v1255, %v1256
          %1298 = vadd.xlane.f32.xlu0 %v1297
          %v1299 = vpop.xlane.xlu0 %1298
          %v1300 = vadd.f32 %v1257, %v1258
          %1301 = vadd.xlane.f32.xlu0 %v1300
          %v1302 = vpop.xlane.xlu0 %1301
          %v1303 = vadd.f32 %v1259, %v1260
          %1304 = vadd.xlane.f32.xlu0 %v1303
          %v1305 = vpop.xlane.xlu0 %1304
          %v1306 = vadd.f32 %v1261, %v1262
          %1307 = vadd.xlane.f32.xlu0 %v1306
          %v1308 = vpop.xlane.xlu0 %1307
          %v1309 = vadd.f32 %v1263, %v1264
          %1310 = vadd.xlane.f32.xlu0 %v1309
          %v1311 = vpop.xlane.xlu0 %1310
          %v1312 = vadd.f32 %v1265, %v1266
          %1313 = vadd.xlane.f32.xlu0 %v1312
          %v1314 = vpop.xlane.xlu0 %1313
          %v1315 = vadd.f32 %v1187, %v1269
          %v1316 = vadd.f32 %v1188, %v1272
          %v1317 = vadd.f32 %v1189, %v1275
          %v1318 = vadd.f32 %v1190, %v1278
          %v1319 = vadd.f32 %v1191, %v1281
          %v1320 = vadd.f32 %v1192, %v1284
          %v1321 = vadd.f32 %v1193, %v1287
          %v1322 = vadd.f32 %v1194, %v1290
          %v1323 = vadd.f32 %v1195, %v1293
          %v1324 = vadd.f32 %v1196, %v1296
          %v1325 = vadd.f32 %v1197, %v1299
          %v1326 = vadd.f32 %v1198, %v1302
          %v1327 = vadd.f32 %v1199, %v1305
          %v1328 = vadd.f32 %v1200, %v1308
          %v1329 = vadd.f32 %v1201, %v1311
          %v1330 = vadd.f32 %v1202, %v1314
          %1331 = vst [vmem:[#allocation4] sm:$0xff] %v1315
          %1332 = vst [vmem:[#allocation4 + $0x8] sm:$0xff] %v1316
          %1333 = vst [vmem:[#allocation4 + $0x10] sm:$0xff] %v1317
          %1334 = vst [vmem:[#allocation4 + $0x18] sm:$0xff] %v1318
          %1335 = vst [vmem:[#allocation4 + $0x20] sm:$0xff] %v1319
          %1336 = vst [vmem:[#allocation4 + $0x28] sm:$0xff] %v1320
          %1337 = vst [vmem:[#allocation4 + $0x30] sm:$0xff] %v1321
          %1338 = vst [vmem:[#allocation4 + $0x38] sm:$0xff] %v1322
          %1339 = vst [vmem:[#allocation4 + $0x40] sm:$0xff] %v1323
          %1340 = vst [vmem:[#allocation4 + $0x48] sm:$0xff] %v1324
          %1341 = vst [vmem:[#allocation4 + $0x50] sm:$0xff] %v1325
          %1342 = vst [vmem:[#allocation4 + $0x58] sm:$0xff] %v1326
          %1343 = vst [vmem:[#allocation4 + $0x60] sm:$0xff] %v1327
          %1344 = vst [vmem:[#allocation4 + $0x68] sm:$0xff] %v1328
          %1345 = vst [vmem:[#allocation4 + $0x70] sm:$0xff] %v1329
          %1346 = vst [vmem:[#allocation4 + $0x78] sm:$0xff] %v1330
        $region52: #{tpu_custom_call.1} parent=31 // pred_fallthru
          _
        %p1347 = pneg %p713
        // Predicated region
        $region53: #{tpu_custom_call.1} parent=31 // pred_check
          _
        $region54: #{tpu_custom_call.1} parent=31 // pred_check_branch
          %1349 = sbr.rel (%p713) target = $region56
        $region55: #{tpu_custom_call.1} parent=31 // pred_region
          %v1350 = vsub.f32 %v611, 10.0
          %v1351 = vsub.f32 %v613, 10.0
          %v1352 = vsub.f32 %v615, 10.0
          %v1353 = vsub.f32 %v617, 10.0
          %v1354 = vsub.f32 %v621, 10.0
          %v1355 = vsub.f32 %v623, 10.0
          %v1356 = vsub.f32 %v625, 10.0
          %v1357 = vsub.f32 %v627, 10.0
          %v1358 = vsub.f32 %v631, 10.0
          %v1359 = vsub.f32 %v633, 10.0
          %v1360 = vsub.f32 %v635, 10.0
          %v1361 = vsub.f32 %v637, 10.0
          %v1362 = vsub.f32 %v641, 10.0
          %v1363 = vsub.f32 %v643, 10.0
          %v1364 = vsub.f32 %v645, 10.0
          %v1365 = vsub.f32 %v647, 10.0
          %v1366 = vsub.f32 %v651, 10.0
          %v1367 = vsub.f32 %v653, 10.0
          %v1368 = vsub.f32 %v655, 10.0
          %v1369 = vsub.f32 %v657, 10.0
          %v1370 = vsub.f32 %v661, 10.0
          %v1371 = vsub.f32 %v663, 10.0
          %v1372 = vsub.f32 %v665, 10.0
          %v1373 = vsub.f32 %v667, 10.0
          %v1374 = vsub.f32 %v671, 10.0
          %v1375 = vsub.f32 %v673, 10.0
          %v1376 = vsub.f32 %v675, 10.0
          %v1377 = vsub.f32 %v677, 10.0
          %v1378 = vsub.f32 %v681, 10.0
          %v1379 = vsub.f32 %v683, 10.0
          %v1380 = vsub.f32 %v685, 10.0
          %v1381 = vsub.f32 %v687, 10.0
          %v1382 = vmul.f32 %v1350, 1.442695
          %v1383 = vpow.pop %v1382
          %v1384 = vmul.f32 %v1351, 1.442695
          %v1385 = vpow.pop %v1384
          %v1386 = vmul.f32 %v1352, 1.442695
          %v1387 = vpow.pop %v1386
          %v1388 = vmul.f32 %v1353, 1.442695
          %v1389 = vpow.pop %v1388
          %v1390 = vmul.f32 %v1354, 1.442695
          %v1391 = vpow.pop %v1390
          %v1392 = vmul.f32 %v1355, 1.442695
          %v1393 = vpow.pop %v1392
          %v1394 = vmul.f32 %v1356, 1.442695
          %v1395 = vpow.pop %v1394
          %v1396 = vmul.f32 %v1357, 1.442695
          %v1397 = vpow.pop %v1396
          %v1398 = vmul.f32 %v1358, 1.442695
          %v1399 = vpow.pop %v1398
          %v1400 = vmul.f32 %v1359, 1.442695
          %v1401 = vpow.pop %v1400
          %v1402 = vmul.f32 %v1360, 1.442695
          %v1403 = vpow.pop %v1402
          %v1404 = vmul.f32 %v1361, 1.442695
          %v1405 = vpow.pop %v1404
          %v1406 = vmul.f32 %v1362, 1.442695
          %v1407 = vpow.pop %v1406
          %v1408 = vmul.f32 %v1363, 1.442695
          %v1409 = vpow.pop %v1408
          %v1410 = vmul.f32 %v1364, 1.442695
          %v1411 = vpow.pop %v1410
          %v1412 = vmul.f32 %v1365, 1.442695
          %v1413 = vpow.pop %v1412
          %v1414 = vmul.f32 %v1366, 1.442695
          %v1415 = vpow.pop %v1414
          %v1416 = vmul.f32 %v1367, 1.442695
          %v1417 = vpow.pop %v1416
          %v1418 = vmul.f32 %v1368, 1.442695
          %v1419 = vpow.pop %v1418
          %v1420 = vmul.f32 %v1369, 1.442695
          %v1421 = vpow.pop %v1420
          %v1422 = vmul.f32 %v1370, 1.442695
          %v1423 = vpow.pop %v1422
          %v1424 = vmul.f32 %v1371, 1.442695
          %v1425 = vpow.pop %v1424
          %v1426 = vmul.f32 %v1372, 1.442695
          %v1427 = vpow.pop %v1426
          %v1428 = vmul.f32 %v1373, 1.442695
          %v1429 = vpow.pop %v1428
          %v1430 = vmul.f32 %v1374, 1.442695
          %v1431 = vpow.pop %v1430
          %v1432 = vmul.f32 %v1375, 1.442695
          %v1433 = vpow.pop %v1432
          %v1434 = vmul.f32 %v1376, 1.442695
          %v1435 = vpow.pop %v1434
          %v1436 = vmul.f32 %v1377, 1.442695
          %v1437 = vpow.pop %v1436
          %v1438 = vmul.f32 %v1378, 1.442695
          %v1439 = vpow.pop %v1438
          %v1440 = vmul.f32 %v1379, 1.442695
          %v1441 = vpow.pop %v1440
          %v1442 = vmul.f32 %v1380, 1.442695
          %v1443 = vpow.pop %v1442
          %v1444 = vmul.f32 %v1381, 1.442695
          %v1445 = vpow.pop %v1444
          %v1446 = vld [vmem:[#allocation3] sm:$0xff]
          %v1447 = vld [vmem:[#allocation3 + $0x8] sm:$0xff]
          %v1448 = vld [vmem:[#allocation3 + $0x10] sm:$0xff]
          %v1449 = vld [vmem:[#allocation3 + $0x18] sm:$0xff]
          %v1450 = vld [vmem:[#allocation3 + $0x20] sm:$0xff]
          %v1451 = vld [vmem:[#allocation3 + $0x28] sm:$0xff]
          %v1452 = vld [vmem:[#allocation3 + $0x30] sm:$0xff]
          %v1453 = vld [vmem:[#allocation3 + $0x38] sm:$0xff]
          %v1454 = vld [vmem:[#allocation3 + $0x40] sm:$0xff]
          %v1455 = vld [vmem:[#allocation3 + $0x48] sm:$0xff]
          %v1456 = vld [vmem:[#allocation3 + $0x50] sm:$0xff]
          %v1457 = vld [vmem:[#allocation3 + $0x58] sm:$0xff]
          %v1458 = vld [vmem:[#allocation3 + $0x60] sm:$0xff]
          %v1459 = vld [vmem:[#allocation3 + $0x68] sm:$0xff]
          %v1460 = vld [vmem:[#allocation3 + $0x70] sm:$0xff]
          %v1461 = vld [vmem:[#allocation3 + $0x78] sm:$0xff]
          %v1462 = vadd.f32 %v1383, %v1385
          %1463 = vadd.xlane.f32.xlu0 %v1462
          %v1464 = vpop.xlane.xlu0 %1463
          %v1465 = vadd.f32 %v1387, %v1389
          %1466 = vadd.xlane.f32.xlu0 %v1465
          %v1467 = vpop.xlane.xlu0 %1466
          %v1468 = vadd.f32 %v1391, %v1393
          %1469 = vadd.xlane.f32.xlu0 %v1468
          %v1470 = vpop.xlane.xlu0 %1469
          %v1471 = vadd.f32 %v1395, %v1397
          %1472 = vadd.xlane.f32.xlu0 %v1471
          %v1473 = vpop.xlane.xlu0 %1472
          %v1474 = vadd.f32 %v1399, %v1401
          %1475 = vadd.xlane.f32.xlu0 %v1474
          %v1476 = vpop.xlane.xlu0 %1475
          %v1477 = vadd.f32 %v1403, %v1405
          %1478 = vadd.xlane.f32.xlu0 %v1477
          %v1479 = vpop.xlane.xlu0 %1478
          %v1480 = vadd.f32 %v1407, %v1409
          %1481 = vadd.xlane.f32.xlu0 %v1480
          %v1482 = vpop.xlane.xlu0 %1481
          %v1483 = vadd.f32 %v1411, %v1413
          %1484 = vadd.xlane.f32.xlu0 %v1483
          %v1485 = vpop.xlane.xlu0 %1484
          %v1486 = vadd.f32 %v1415, %v1417
          %1487 = vadd.xlane.f32.xlu0 %v1486
          %v1488 = vpop.xlane.xlu0 %1487
          %v1489 = vadd.f32 %v1419, %v1421
          %1490 = vadd.xlane.f32.xlu0 %v1489
          %v1491 = vpop.xlane.xlu0 %1490
          %v1492 = vadd.f32 %v1423, %v1425
          %1493 = vadd.xlane.f32.xlu0 %v1492
          %v1494 = vpop.xlane.xlu0 %1493
          %v1495 = vadd.f32 %v1427, %v1429
          %1496 = vadd.xlane.f32.xlu0 %v1495
          %v1497 = vpop.xlane.xlu0 %1496
          %v1498 = vadd.f32 %v1431, %v1433
          %1499 = vadd.xlane.f32.xlu0 %v1498
          %v1500 = vpop.xlane.xlu0 %1499
          %v1501 = vadd.f32 %v1435, %v1437
          %1502 = vadd.xlane.f32.xlu0 %v1501
          %v1503 = vpop.xlane.xlu0 %1502
          %v1504 = vadd.f32 %v1439, %v1441
          %1505 = vadd.xlane.f32.xlu0 %v1504
          %v1506 = vpop.xlane.xlu0 %1505
          %v1507 = vadd.f32 %v1443, %v1445
          %1508 = vadd.xlane.f32.xlu0 %v1507
          %v1509 = vpop.xlane.xlu0 %1508
          %v1510 = vadd.f32 %v1446, %v1464
          %v1511 = vadd.f32 %v1447, %v1467
          %v1512 = vadd.f32 %v1448, %v1470
          %v1513 = vadd.f32 %v1449, %v1473
          %v1514 = vadd.f32 %v1450, %v1476
          %v1515 = vadd.f32 %v1451, %v1479
          %v1516 = vadd.f32 %v1452, %v1482
          %v1517 = vadd.f32 %v1453, %v1485
          %v1518 = vadd.f32 %v1454, %v1488
          %v1519 = vadd.f32 %v1455, %v1491
          %v1520 = vadd.f32 %v1456, %v1494
          %v1521 = vadd.f32 %v1457, %v1497
          %v1522 = vadd.f32 %v1458, %v1500
          %v1523 = vadd.f32 %v1459, %v1503
          %v1524 = vadd.f32 %v1460, %v1506
          %v1525 = vadd.f32 %v1461, %v1509
          %1526 = vst [vmem:[#allocation3] sm:$0xff] %v1510
          %1527 = vst [vmem:[#allocation3 + $0x8] sm:$0xff] %v1511
          %1528 = vst [vmem:[#allocation3 + $0x10] sm:$0xff] %v1512
          %1529 = vst [vmem:[#allocation3 + $0x18] sm:$0xff] %v1513
          %1530 = vst [vmem:[#allocation3 + $0x20] sm:$0xff] %v1514
          %1531 = vst [vmem:[#allocation3 + $0x28] sm:$0xff] %v1515
          %1532 = vst [vmem:[#allocation3 + $0x30] sm:$0xff] %v1516
          %1533 = vst [vmem:[#allocation3 + $0x38] sm:$0xff] %v1517
          %1534 = vst [vmem:[#allocation3 + $0x40] sm:$0xff] %v1518
          %1535 = vst [vmem:[#allocation3 + $0x48] sm:$0xff] %v1519
          %1536 = vst [vmem:[#allocation3 + $0x50] sm:$0xff] %v1520
          %1537 = vst [vmem:[#allocation3 + $0x58] sm:$0xff] %v1521
          %1538 = vst [vmem:[#allocation3 + $0x60] sm:$0xff] %v1522
          %1539 = vst [vmem:[#allocation3 + $0x68] sm:$0xff] %v1523
          %1540 = vst [vmem:[#allocation3 + $0x70] sm:$0xff] %v1524
          %1541 = vst [vmem:[#allocation3 + $0x78] sm:$0xff] %v1525
          %vm1542 = vcmp.gt.f32.partialorder %v611, %v689
          %vm1543 = vcmp.gt.f32.partialorder %v613, %v689
          %vm1544 = vcmp.gt.f32.partialorder %v615, %v690
          %vm1545 = vcmp.gt.f32.partialorder %v617, %v690
          %vm1546 = vcmp.gt.f32.partialorder %v621, %v691
          %vm1547 = vcmp.gt.f32.partialorder %v623, %v691
          %vm1548 = vcmp.gt.f32.partialorder %v625, %v692
          %vm1549 = vcmp.gt.f32.partialorder %v627, %v692
          %vm1550 = vcmp.gt.f32.partialorder %v631, %v693
          %vm1551 = vcmp.gt.f32.partialorder %v633, %v693
          %vm1552 = vcmp.gt.f32.partialorder %v635, %v694
          %vm1553 = vcmp.gt.f32.partialorder %v637, %v694
          %vm1554 = vcmp.gt.f32.partialorder %v641, %v695
          %vm1555 = vcmp.gt.f32.partialorder %v643, %v695
          %vm1556 = vcmp.gt.f32.partialorder %v645, %v696
          %vm1557 = vcmp.gt.f32.partialorder %v647, %v696
          %vm1558 = vcmp.gt.f32.partialorder %v651, %v697
          %vm1559 = vcmp.gt.f32.partialorder %v653, %v697
          %vm1560 = vcmp.gt.f32.partialorder %v655, %v698
          %vm1561 = vcmp.gt.f32.partialorder %v657, %v698
          %vm1562 = vcmp.gt.f32.partialorder %v661, %v699
          %vm1563 = vcmp.gt.f32.partialorder %v663, %v699
          %vm1564 = vcmp.gt.f32.partialorder %v665, %v700
          %vm1565 = vcmp.gt.f32.partialorder %v667, %v700
          %vm1566 = vcmp.gt.f32.partialorder %v671, %v701
          %vm1567 = vcmp.gt.f32.partialorder %v673, %v701
          %vm1568 = vcmp.gt.f32.partialorder %v675, %v702
          %vm1569 = vcmp.gt.f32.partialorder %v677, %v702
          %vm1570 = vcmp.gt.f32.partialorder %v681, %v703
          %vm1571 = vcmp.gt.f32.partialorder %v683, %v703
          %vm1572 = vcmp.gt.f32.partialorder %v685, %v704
          %vm1573 = vcmp.gt.f32.partialorder %v687, %v704
          %v1574 = vld [vmem:[#allocation4] sm:$0xff]
          %v1575 = vld [vmem:[#allocation4 + $0x8] sm:$0xff]
          %v1576 = vld [vmem:[#allocation4 + $0x10] sm:$0xff]
          %v1577 = vld [vmem:[#allocation4 + $0x18] sm:$0xff]
          %v1578 = vld [vmem:[#allocation4 + $0x20] sm:$0xff]
          %v1579 = vld [vmem:[#allocation4 + $0x28] sm:$0xff]
          %v1580 = vld [vmem:[#allocation4 + $0x30] sm:$0xff]
          %v1581 = vld [vmem:[#allocation4 + $0x38] sm:$0xff]
          %v1582 = vld [vmem:[#allocation4 + $0x40] sm:$0xff]
          %v1583 = vld [vmem:[#allocation4 + $0x48] sm:$0xff]
          %v1584 = vld [vmem:[#allocation4 + $0x50] sm:$0xff]
          %v1585 = vld [vmem:[#allocation4 + $0x58] sm:$0xff]
          %v1586 = vld [vmem:[#allocation4 + $0x60] sm:$0xff]
          %v1587 = vld [vmem:[#allocation4 + $0x68] sm:$0xff]
          %v1588 = vld [vmem:[#allocation4 + $0x70] sm:$0xff]
          %v1589 = vld [vmem:[#allocation4 + $0x78] sm:$0xff]
          %v1590 = vsel %vm1542, 1, 0
          %v1591 = vsel %vm1543, 1, 0
          %v1592 = vsel %vm1544, 1, 0
          %v1593 = vsel %vm1545, 1, 0
          %v1594 = vsel %vm1546, 1, 0
          %v1595 = vsel %vm1547, 1, 0
          %v1596 = vsel %vm1548, 1, 0
          %v1597 = vsel %vm1549, 1, 0
          %v1598 = vsel %vm1550, 1, 0
          %v1599 = vsel %vm1551, 1, 0
          %v1600 = vsel %vm1552, 1, 0
          %v1601 = vsel %vm1553, 1, 0
          %v1602 = vsel %vm1554, 1, 0
          %v1603 = vsel %vm1555, 1, 0
          %v1604 = vsel %vm1556, 1, 0
          %v1605 = vsel %vm1557, 1, 0
          %v1606 = vsel %vm1558, 1, 0
          %v1607 = vsel %vm1559, 1, 0
          %v1608 = vsel %vm1560, 1, 0
          %v1609 = vsel %vm1561, 1, 0
          %v1610 = vsel %vm1562, 1, 0
          %v1611 = vsel %vm1563, 1, 0
          %v1612 = vsel %vm1564, 1, 0
          %v1613 = vsel %vm1565, 1, 0
          %v1614 = vsel %vm1566, 1, 0
          %v1615 = vsel %vm1567, 1, 0
          %v1616 = vsel %vm1568, 1, 0
          %v1617 = vsel %vm1569, 1, 0
          %v1618 = vsel %vm1570, 1, 0
          %v1619 = vsel %vm1571, 1, 0
          %v1620 = vsel %vm1572, 1, 0
          %v1621 = vsel %vm1573, 1, 0
          %v1622 = vcvt.s32.f32 %v1590
          %v1623 = vcvt.s32.f32 %v1591
          %v1624 = vcvt.s32.f32 %v1592
          %v1625 = vcvt.s32.f32 %v1593
          %v1626 = vcvt.s32.f32 %v1594
          %v1627 = vcvt.s32.f32 %v1595
          %v1628 = vcvt.s32.f32 %v1596
          %v1629 = vcvt.s32.f32 %v1597
          %v1630 = vcvt.s32.f32 %v1598
          %v1631 = vcvt.s32.f32 %v1599
          %v1632 = vcvt.s32.f32 %v1600
          %v1633 = vcvt.s32.f32 %v1601
          %v1634 = vcvt.s32.f32 %v1602
          %v1635 = vcvt.s32.f32 %v1603
          %v1636 = vcvt.s32.f32 %v1604
          %v1637 = vcvt.s32.f32 %v1605
          %v1638 = vcvt.s32.f32 %v1606
          %v1639 = vcvt.s32.f32 %v1607
          %v1640 = vcvt.s32.f32 %v1608
          %v1641 = vcvt.s32.f32 %v1609
          %v1642 = vcvt.s32.f32 %v1610
          %v1643 = vcvt.s32.f32 %v1611
          %v1644 = vcvt.s32.f32 %v1612
          %v1645 = vcvt.s32.f32 %v1613
          %v1646 = vcvt.s32.f32 %v1614
          %v1647 = vcvt.s32.f32 %v1615
          %v1648 = vcvt.s32.f32 %v1616
          %v1649 = vcvt.s32.f32 %v1617
          %v1650 = vcvt.s32.f32 %v1618
          %v1651 = vcvt.s32.f32 %v1619
          %v1652 = vcvt.s32.f32 %v1620
          %v1653 = vcvt.s32.f32 %v1621
          %v1654 = vadd.f32 %v1622, %v1623
          %1655 = vadd.xlane.f32.xlu0 %v1654
          %v1656 = vpop.xlane.xlu0 %1655
          %v1657 = vadd.f32 %v1624, %v1625
          %1658 = vadd.xlane.f32.xlu0 %v1657
          %v1659 = vpop.xlane.xlu0 %1658
          %v1660 = vadd.f32 %v1626, %v1627
          %1661 = vadd.xlane.f32.xlu0 %v1660
          %v1662 = vpop.xlane.xlu0 %1661
          %v1663 = vadd.f32 %v1628, %v1629
          %1664 = vadd.xlane.f32.xlu0 %v1663
          %v1665 = vpop.xlane.xlu0 %1664
          %v1666 = vadd.f32 %v1630, %v1631
          %1667 = vadd.xlane.f32.xlu0 %v1666
          %v1668 = vpop.xlane.xlu0 %1667
          %v1669 = vadd.f32 %v1632, %v1633
          %1670 = vadd.xlane.f32.xlu0 %v1669
          %v1671 = vpop.xlane.xlu0 %1670
          %v1672 = vadd.f32 %v1634, %v1635
          %1673 = vadd.xlane.f32.xlu0 %v1672
          %v1674 = vpop.xlane.xlu0 %1673
          %v1675 = vadd.f32 %v1636, %v1637
          %1676 = vadd.xlane.f32.xlu0 %v1675
          %v1677 = vpop.xlane.xlu0 %1676
          %v1678 = vadd.f32 %v1638, %v1639
          %1679 = vadd.xlane.f32.xlu0 %v1678
          %v1680 = vpop.xlane.xlu0 %1679
          %v1681 = vadd.f32 %v1640, %v1641
          %1682 = vadd.xlane.f32.xlu0 %v1681
          %v1683 = vpop.xlane.xlu0 %1682
          %v1684 = vadd.f32 %v1642, %v1643
          %1685 = vadd.xlane.f32.xlu0 %v1684
          %v1686 = vpop.xlane.xlu0 %1685
          %v1687 = vadd.f32 %v1644, %v1645
          %1688 = vadd.xlane.f32.xlu0 %v1687
          %v1689 = vpop.xlane.xlu0 %1688
          %v1690 = vadd.f32 %v1646, %v1647
          %1691 = vadd.xlane.f32.xlu0 %v1690
          %v1692 = vpop.xlane.xlu0 %1691
          %v1693 = vadd.f32 %v1648, %v1649
          %1694 = vadd.xlane.f32.xlu0 %v1693
          %v1695 = vpop.xlane.xlu0 %1694
          %v1696 = vadd.f32 %v1650, %v1651
          %1697 = vadd.xlane.f32.xlu0 %v1696
          %v1698 = vpop.xlane.xlu0 %1697
          %v1699 = vadd.f32 %v1652, %v1653
          %1700 = vadd.xlane.f32.xlu0 %v1699
          %v1701 = vpop.xlane.xlu0 %1700
          %v1702 = vadd.f32 %v1574, %v1656
          %v1703 = vadd.f32 %v1575, %v1659
          %v1704 = vadd.f32 %v1576, %v1662
          %v1705 = vadd.f32 %v1577, %v1665
          %v1706 = vadd.f32 %v1578, %v1668
          %v1707 = vadd.f32 %v1579, %v1671
          %v1708 = vadd.f32 %v1580, %v1674
          %v1709 = vadd.f32 %v1581, %v1677
          %v1710 = vadd.f32 %v1582, %v1680
          %v1711 = vadd.f32 %v1583, %v1683
          %v1712 = vadd.f32 %v1584, %v1686
          %v1713 = vadd.f32 %v1585, %v1689
          %v1714 = vadd.f32 %v1586, %v1692
          %v1715 = vadd.f32 %v1587, %v1695
          %v1716 = vadd.f32 %v1588, %v1698
          %v1717 = vadd.f32 %v1589, %v1701
          %1718 = vst [vmem:[#allocation4] sm:$0xff] %v1702
          %1719 = vst [vmem:[#allocation4 + $0x8] sm:$0xff] %v1703
          %1720 = vst [vmem:[#allocation4 + $0x10] sm:$0xff] %v1704
          %1721 = vst [vmem:[#allocation4 + $0x18] sm:$0xff] %v1705
          %1722 = vst [vmem:[#allocation4 + $0x20] sm:$0xff] %v1706
          %1723 = vst [vmem:[#allocation4 + $0x28] sm:$0xff] %v1707
          %1724 = vst [vmem:[#allocation4 + $0x30] sm:$0xff] %v1708
          %1725 = vst [vmem:[#allocation4 + $0x38] sm:$0xff] %v1709
          %1726 = vst [vmem:[#allocation4 + $0x40] sm:$0xff] %v1710
          %1727 = vst [vmem:[#allocation4 + $0x48] sm:$0xff] %v1711
          %1728 = vst [vmem:[#allocation4 + $0x50] sm:$0xff] %v1712
          %1729 = vst [vmem:[#allocation4 + $0x58] sm:$0xff] %v1713
          %1730 = vst [vmem:[#allocation4 + $0x60] sm:$0xff] %v1714
          %1731 = vst [vmem:[#allocation4 + $0x68] sm:$0xff] %v1715
          %1732 = vst [vmem:[#allocation4 + $0x70] sm:$0xff] %v1716
          %1733 = vst [vmem:[#allocation4 + $0x78] sm:$0xff] %v1717
        $region56: #{tpu_custom_call.1} parent=31 // pred_fallthru
          _
        // Predicated region
        $region57: #{tpu_custom_call.1} parent=31 // pred_check
          %p1734 = pneg %p284
        $region58: #{tpu_custom_call.1} parent=31 // pred_check_branch
          %1736 = sbr.rel (%p1734) target = $region60
        $region59: #{tpu_custom_call.1} parent=31 // pred_region
          %v1737 = vld [vmem:[#allocation3] sm:$0xff]
          %v1738 = vld [vmem:[#allocation3 + $0x8] sm:$0xff]
          %v1739 = vld [vmem:[#allocation3 + $0x10] sm:$0xff]
          %v1740 = vld [vmem:[#allocation3 + $0x18] sm:$0xff]
          %v1741 = vld [vmem:[#allocation3 + $0x20] sm:$0xff]
          %v1742 = vld [vmem:[#allocation3 + $0x28] sm:$0xff]
          %v1743 = vld [vmem:[#allocation3 + $0x30] sm:$0xff]
          %v1744 = vld [vmem:[#allocation3 + $0x38] sm:$0xff]
          %v1745 = vld [vmem:[#allocation3 + $0x40] sm:$0xff]
          %v1746 = vld [vmem:[#allocation3 + $0x48] sm:$0xff]
          %v1747 = vld [vmem:[#allocation3 + $0x50] sm:$0xff]
          %v1748 = vld [vmem:[#allocation3 + $0x58] sm:$0xff]
          %v1749 = vld [vmem:[#allocation3 + $0x60] sm:$0xff]
          %v1750 = vld [vmem:[#allocation3 + $0x68] sm:$0xff]
          %v1751 = vld [vmem:[#allocation3 + $0x70] sm:$0xff]
          %v1752 = vld [vmem:[#allocation3 + $0x78] sm:$0xff]
          %v1753 = vld [vmem:[#allocation4] sm:$0xff]
          %v1754 = vld [vmem:[#allocation4 + $0x8] sm:$0xff]
          %v1755 = vld [vmem:[#allocation4 + $0x10] sm:$0xff]
          %v1756 = vld [vmem:[#allocation4 + $0x18] sm:$0xff]
          %v1757 = vld [vmem:[#allocation4 + $0x20] sm:$0xff]
          %v1758 = vld [vmem:[#allocation4 + $0x28] sm:$0xff]
          %v1759 = vld [vmem:[#allocation4 + $0x30] sm:$0xff]
          %v1760 = vld [vmem:[#allocation4 + $0x38] sm:$0xff]
          %v1761 = vld [vmem:[#allocation4 + $0x40] sm:$0xff]
          %v1762 = vld [vmem:[#allocation4 + $0x48] sm:$0xff]
          %v1763 = vld [vmem:[#allocation4 + $0x50] sm:$0xff]
          %v1764 = vld [vmem:[#allocation4 + $0x58] sm:$0xff]
          %v1765 = vld [vmem:[#allocation4 + $0x60] sm:$0xff]
          %v1766 = vld [vmem:[#allocation4 + $0x68] sm:$0xff]
          %v1767 = vld [vmem:[#allocation4 + $0x70] sm:$0xff]
          %v1768 = vld [vmem:[#allocation4 + $0x78] sm:$0xff]
          %v1769 = vld [vmem:[%s231] sm:$0xff]
          %v1770 = vld [vmem:[%s231 + $0x8] sm:$0xff]
          %v1771 = vld [vmem:[%s231 + $0x10] sm:$0xff]
          %v1772 = vld [vmem:[%s231 + $0x18] sm:$0xff]
          %v1773 = vld [vmem:[%s231 + $0x20] sm:$0xff]
          %v1774 = vld [vmem:[%s231 + $0x28] sm:$0xff]
          %v1775 = vld [vmem:[%s231 + $0x30] sm:$0xff]
          %v1776 = vld [vmem:[%s231 + $0x38] sm:$0xff]
          %v1777 = vld [vmem:[%s231 + $0x40] sm:$0xff]
          %v1778 = vld [vmem:[%s231 + $0x48] sm:$0xff]
          %v1779 = vld [vmem:[%s231 + $0x50] sm:$0xff]
          %v1780 = vld [vmem:[%s231 + $0x58] sm:$0xff]
          %v1781 = vld [vmem:[%s231 + $0x60] sm:$0xff]
          %v1782 = vld [vmem:[%s231 + $0x68] sm:$0xff]
          %v1783 = vld [vmem:[%s231 + $0x70] sm:$0xff]
          %v1784 = vld [vmem:[%s231 + $0x78] sm:$0xff]
          %v1785 = vlog2.pop %v1737
          %v1786 = vmul.f32 %v1785, 0.6931472
          %v1787 = vlog2.pop %v1738
          %v1788 = vmul.f32 %v1787, 0.6931472
          %v1789 = vlog2.pop %v1739
          %v1790 = vmul.f32 %v1789, 0.6931472
          %v1791 = vlog2.pop %v1740
          %v1792 = vmul.f32 %v1791, 0.6931472
          %v1793 = vlog2.pop %v1741
          %v1794 = vmul.f32 %v1793, 0.6931472
          %v1795 = vlog2.pop %v1742
          %v1796 = vmul.f32 %v1795, 0.6931472
          %v1797 = vlog2.pop %v1743
          %v1798 = vmul.f32 %v1797, 0.6931472
          %v1799 = vlog2.pop %v1744
          %v1800 = vmul.f32 %v1799, 0.6931472
          %v1801 = vlog2.pop %v1745
          %v1802 = vmul.f32 %v1801, 0.6931472
          %v1803 = vlog2.pop %v1746
          %v1804 = vmul.f32 %v1803, 0.6931472
          %v1805 = vlog2.pop %v1747
          %v1806 = vmul.f32 %v1805, 0.6931472
          %v1807 = vlog2.pop %v1748
          %v1808 = vmul.f32 %v1807, 0.6931472
          %v1809 = vlog2.pop %v1749
          %v1810 = vmul.f32 %v1809, 0.6931472
          %v1811 = vlog2.pop %v1750
          %v1812 = vmul.f32 %v1811, 0.6931472
          %v1813 = vlog2.pop %v1751
          %v1814 = vmul.f32 %v1813, 0.6931472
          %v1815 = vlog2.pop %v1752
          %v1816 = vmul.f32 %v1815, 0.6931472
          %v1817 = vadd.f32 %v1786, 10.0
          %v1818 = vadd.f32 %v1788, 10.0
          %v1819 = vadd.f32 %v1790, 10.0
          %v1820 = vadd.f32 %v1792, 10.0
          %v1821 = vadd.f32 %v1794, 10.0
          %v1822 = vadd.f32 %v1796, 10.0
          %v1823 = vadd.f32 %v1798, 10.0
          %v1824 = vadd.f32 %v1800, 10.0
          %v1825 = vadd.f32 %v1802, 10.0
          %v1826 = vadd.f32 %v1804, 10.0
          %v1827 = vadd.f32 %v1806, 10.0
          %v1828 = vadd.f32 %v1808, 10.0
          %v1829 = vadd.f32 %v1810, 10.0
          %v1830 = vadd.f32 %v1812, 10.0
          %v1831 = vadd.f32 %v1814, 10.0
          %v1832 = vadd.f32 %v1816, 10.0
          %v1833 = vsub.f32 %v1817, %v1769
          %v1834 = vsub.f32 %v1818, %v1770
          %v1835 = vsub.f32 %v1819, %v1771
          %v1836 = vsub.f32 %v1820, %v1772
          %v1837 = vsub.f32 %v1821, %v1773
          %v1838 = vsub.f32 %v1822, %v1774
          %v1839 = vsub.f32 %v1823, %v1775
          %v1840 = vsub.f32 %v1824, %v1776
          %v1841 = vsub.f32 %v1825, %v1777
          %v1842 = vsub.f32 %v1826, %v1778
          %v1843 = vsub.f32 %v1827, %v1779
          %v1844 = vsub.f32 %v1828, %v1780
          %v1845 = vsub.f32 %v1829, %v1781
          %v1846 = vsub.f32 %v1830, %v1782
          %v1847 = vsub.f32 %v1831, %v1783
          %v1848 = vsub.f32 %v1832, %v1784
          %vm1849 = vcmask 7168
          %v1850 = vsel %vm1849, %v1833, 0.0
          %v1851 = vsel %vm1849, %v1834, 0.0
          %v1852 = vadd.f32 %v1850, %v1851
          %v1853 = vsel %vm1849, %v1835, 0.0
          %v1854 = vadd.f32 %v1852, %v1853
          %v1855 = vsel %vm1849, %v1836, 0.0
          %v1856 = vadd.f32 %v1854, %v1855
          %v1857 = vsel %vm1849, %v1837, 0.0
          %v1858 = vadd.f32 %v1856, %v1857
          %v1859 = vsel %vm1849, %v1838, 0.0
          %v1860 = vadd.f32 %v1858, %v1859
          %v1861 = vsel %vm1849, %v1839, 0.0
          %v1862 = vadd.f32 %v1860, %v1861
          %v1863 = vsel %vm1849, %v1840, 0.0
          %v1864 = vadd.f32 %v1862, %v1863
          %v1865 = vsel %vm1849, %v1841, 0.0
          %v1866 = vadd.f32 %v1864, %v1865
          %v1867 = vsel %vm1849, %v1842, 0.0
          %v1868 = vadd.f32 %v1866, %v1867
          %v1869 = vsel %vm1849, %v1843, 0.0
          %v1870 = vadd.f32 %v1868, %v1869
          %v1871 = vsel %vm1849, %v1844, 0.0
          %v1872 = vadd.f32 %v1870, %v1871
          %v1873 = vsel %vm1849, %v1845, 0.0
          %v1874 = vadd.f32 %v1872, %v1873
          %v1875 = vsel %vm1849, %v1846, 0.0
          %v1876 = vadd.f32 %v1874, %v1875
          %v1877 = vsel %vm1849, %v1847, 0.0
          %v1878 = vadd.f32 %v1876, %v1877
          %v1879 = vsel %vm1849, %v1848, 0.0
          %v1880 = vadd.f32 %v1878, %v1879
          %1881 = vadd.xlane.f32.xlu0 %v1880
          %v1882 = vpop.xlane.xlu0 %1881
          %v1883 = vrot.slane %v1882, 4
          %v1884 = vadd.f32 %v1882, %v1883
          %v1885 = vrot.slane %v1884, 2
          %v1886 = vadd.f32 %v1884, %v1885
          %v1887 = vrot.slane %v1886, 1
          %v1888 = vadd.f32 %v1886, %v1887
          %s1889 = vtos %v1888
          %vm1890 = vcmp.lt.f32.partialorder %v1753, 1.0
          %vm1891 = vcmp.lt.f32.partialorder %v1754, 1.0
          %vm1892 = vcmp.lt.f32.partialorder %v1755, 1.0
          %vm1893 = vcmp.lt.f32.partialorder %v1756, 1.0
          %vm1894 = vcmp.lt.f32.partialorder %v1757, 1.0
          %vm1895 = vcmp.lt.f32.partialorder %v1758, 1.0
          %vm1896 = vcmp.lt.f32.partialorder %v1759, 1.0
          %vm1897 = vcmp.lt.f32.partialorder %v1760, 1.0
          %vm1898 = vcmp.lt.f32.partialorder %v1761, 1.0
          %vm1899 = vcmp.lt.f32.partialorder %v1762, 1.0
          %vm1900 = vcmp.lt.f32.partialorder %v1763, 1.0
          %vm1901 = vcmp.lt.f32.partialorder %v1764, 1.0
          %vm1902 = vcmp.lt.f32.partialorder %v1765, 1.0
          %vm1903 = vcmp.lt.f32.partialorder %v1766, 1.0
          %vm1904 = vcmp.lt.f32.partialorder %v1767, 1.0
          %vm1905 = vcmp.lt.f32.partialorder %v1768, 1.0
          %v1906 = vsel %vm1890, 1, 0
          %v1907 = vsel %vm1891, 1, 0
          %v1908 = vsel %vm1892, 1, 0
          %v1909 = vsel %vm1893, 1, 0
          %v1910 = vsel %vm1894, 1, 0
          %v1911 = vsel %vm1895, 1, 0
          %v1912 = vsel %vm1896, 1, 0
          %v1913 = vsel %vm1897, 1, 0
          %v1914 = vsel %vm1898, 1, 0
          %v1915 = vsel %vm1899, 1, 0
          %v1916 = vsel %vm1900, 1, 0
          %v1917 = vsel %vm1901, 1, 0
          %v1918 = vsel %vm1902, 1, 0
          %v1919 = vsel %vm1903, 1, 0
          %v1920 = vsel %vm1904, 1, 0
          %v1921 = vsel %vm1905, 1, 0
          %v1922 = vcvt.s32.f32 %v1906
          %v1923 = vcvt.s32.f32 %v1907
          %v1924 = vcvt.s32.f32 %v1908
          %v1925 = vcvt.s32.f32 %v1909
          %v1926 = vcvt.s32.f32 %v1910
          %v1927 = vcvt.s32.f32 %v1911
          %v1928 = vcvt.s32.f32 %v1912
          %v1929 = vcvt.s32.f32 %v1913
          %v1930 = vcvt.s32.f32 %v1914
          %v1931 = vcvt.s32.f32 %v1915
          %v1932 = vcvt.s32.f32 %v1916
          %v1933 = vcvt.s32.f32 %v1917
          %v1934 = vcvt.s32.f32 %v1918
          %v1935 = vcvt.s32.f32 %v1919
          %v1936 = vcvt.s32.f32 %v1920
          %v1937 = vcvt.s32.f32 %v1921
          %v1938 = vsel %vm1849, %v1922, 0.0
          %v1939 = vsel %vm1849, %v1923, 0.0
          %v1940 = vadd.f32 %v1938, %v1939
          %v1941 = vsel %vm1849, %v1924, 0.0
          %v1942 = vadd.f32 %v1940, %v1941
          %v1943 = vsel %vm1849, %v1925, 0.0
          %v1944 = vadd.f32 %v1942, %v1943
          %v1945 = vsel %vm1849, %v1926, 0.0
          %v1946 = vadd.f32 %v1944, %v1945
          %v1947 = vsel %vm1849, %v1927, 0.0
          %v1948 = vadd.f32 %v1946, %v1947
          %v1949 = vsel %vm1849, %v1928, 0.0
          %v1950 = vadd.f32 %v1948, %v1949
          %v1951 = vsel %vm1849, %v1929, 0.0
          %v1952 = vadd.f32 %v1950, %v1951
          %v1953 = vsel %vm1849, %v1930, 0.0
          %v1954 = vadd.f32 %v1952, %v1953
          %v1955 = vsel %vm1849, %v1931, 0.0
          %v1956 = vadd.f32 %v1954, %v1955
          %v1957 = vsel %vm1849, %v1932, 0.0
          %v1958 = vadd.f32 %v1956, %v1957
          %v1959 = vsel %vm1849, %v1933, 0.0
          %v1960 = vadd.f32 %v1958, %v1959
          %v1961 = vsel %vm1849, %v1934, 0.0
          %v1962 = vadd.f32 %v1960, %v1961
          %v1963 = vsel %vm1849, %v1935, 0.0
          %v1964 = vadd.f32 %v1962, %v1963
          %v1965 = vsel %vm1849, %v1936, 0.0
          %v1966 = vadd.f32 %v1964, %v1965
          %v1967 = vsel %vm1849, %v1937, 0.0
          %v1968 = vadd.f32 %v1966, %v1967
          %1969 = vadd.xlane.f32.xlu0 %v1968
          %v1970 = vpop.xlane.xlu0 %1969
          %v1971 = vrot.slane %v1970, 4
          %v1972 = vadd.f32 %v1970, %v1971
          %v1973 = vrot.slane %v1972, 2
          %v1974 = vadd.f32 %v1972, %v1973
          %v1975 = vrot.slane %v1974, 1
          %v1976 = vadd.f32 %v1974, %v1975
          %s1977 = vtos %v1976
          %vm1978 = vcmp.lt.f32.partialorder %v1753, 5.0
          %vm1979 = vcmp.lt.f32.partialorder %v1754, 5.0
          %vm1980 = vcmp.lt.f32.partialorder %v1755, 5.0
          %vm1981 = vcmp.lt.f32.partialorder %v1756, 5.0
          %vm1982 = vcmp.lt.f32.partialorder %v1757, 5.0
          %vm1983 = vcmp.lt.f32.partialorder %v1758, 5.0
          %vm1984 = vcmp.lt.f32.partialorder %v1759, 5.0
          %vm1985 = vcmp.lt.f32.partialorder %v1760, 5.0
          %vm1986 = vcmp.lt.f32.partialorder %v1761, 5.0
          %vm1987 = vcmp.lt.f32.partialorder %v1762, 5.0
          %vm1988 = vcmp.lt.f32.partialorder %v1763, 5.0
          %vm1989 = vcmp.lt.f32.partialorder %v1764, 5.0
          %vm1990 = vcmp.lt.f32.partialorder %v1765, 5.0
          %vm1991 = vcmp.lt.f32.partialorder %v1766, 5.0
          %vm1992 = vcmp.lt.f32.partialorder %v1767, 5.0
          %vm1993 = vcmp.lt.f32.partialorder %v1768, 5.0
          %v1994 = vsel %vm1978, 1, 0
          %v1995 = vsel %vm1979, 1, 0
          %v1996 = vsel %vm1980, 1, 0
          %v1997 = vsel %vm1981, 1, 0
          %v1998 = vsel %vm1982, 1, 0
          %v1999 = vsel %vm1983, 1, 0
          %v2000 = vsel %vm1984, 1, 0
          %v2001 = vsel %vm1985, 1, 0
          %v2002 = vsel %vm1986, 1, 0
          %v2003 = vsel %vm1987, 1, 0
          %v2004 = vsel %vm1988, 1, 0
          %v2005 = vsel %vm1989, 1, 0
          %v2006 = vsel %vm1990, 1, 0
          %v2007 = vsel %vm1991, 1, 0
          %v2008 = vsel %vm1992, 1, 0
          %v2009 = vsel %vm1993, 1, 0
          %v2010 = vcvt.s32.f32 %v1994
          %v2011 = vcvt.s32.f32 %v1995
          %v2012 = vcvt.s32.f32 %v1996
          %v2013 = vcvt.s32.f32 %v1997
          %v2014 = vcvt.s32.f32 %v1998
          %v2015 = vcvt.s32.f32 %v1999
          %v2016 = vcvt.s32.f32 %v2000
          %v2017 = vcvt.s32.f32 %v2001
          %v2018 = vcvt.s32.f32 %v2002
          %v2019 = vcvt.s32.f32 %v2003
          %v2020 = vcvt.s32.f32 %v2004
          %v2021 = vcvt.s32.f32 %v2005
          %v2022 = vcvt.s32.f32 %v2006
          %v2023 = vcvt.s32.f32 %v2007
          %v2024 = vcvt.s32.f32 %v2008
          %v2025 = vcvt.s32.f32 %v2009
          %v2026 = vsel %vm1849, %v2010, 0.0
          %v2027 = vsel %vm1849, %v2011, 0.0
          %v2028 = vadd.f32 %v2026, %v2027
          %v2029 = vsel %vm1849, %v2012, 0.0
          %v2030 = vadd.f32 %v2028, %v2029
          %v2031 = vsel %vm1849, %v2013, 0.0
          %v2032 = vadd.f32 %v2030, %v2031
          %v2033 = vsel %vm1849, %v2014, 0.0
          %v2034 = vadd.f32 %v2032, %v2033
          %v2035 = vsel %vm1849, %v2015, 0.0
          %v2036 = vadd.f32 %v2034, %v2035
          %v2037 = vsel %vm1849, %v2016, 0.0
          %v2038 = vadd.f32 %v2036, %v2037
          %v2039 = vsel %vm1849, %v2017, 0.0
          %v2040 = vadd.f32 %v2038, %v2039
          %v2041 = vsel %vm1849, %v2018, 0.0
          %v2042 = vadd.f32 %v2040, %v2041
          %v2043 = vsel %vm1849, %v2019, 0.0
          %v2044 = vadd.f32 %v2042, %v2043
          %v2045 = vsel %vm1849, %v2020, 0.0
          %v2046 = vadd.f32 %v2044, %v2045
          %v2047 = vsel %vm1849, %v2021, 0.0
          %v2048 = vadd.f32 %v2046, %v2047
          %v2049 = vsel %vm1849, %v2022, 0.0
          %v2050 = vadd.f32 %v2048, %v2049
          %v2051 = vsel %vm1849, %v2023, 0.0
          %v2052 = vadd.f32 %v2050, %v2051
          %v2053 = vsel %vm1849, %v2024, 0.0
          %v2054 = vadd.f32 %v2052, %v2053
          %v2055 = vsel %vm1849, %v2025, 0.0
          %v2056 = vadd.f32 %v2054, %v2055
          %2057 = vadd.xlane.f32.xlu0 %v2056
          %v2058 = vpop.xlane.xlu0 %2057
          %v2059 = vrot.slane %v2058, 4
          %v2060 = vadd.f32 %v2058, %v2059
          %v2061 = vrot.slane %v2060, 2
          %v2062 = vadd.f32 %v2060, %v2061
          %v2063 = vrot.slane %v2062, 1
          %v2064 = vadd.f32 %v2062, %v2063
          %s2065 = vtos %v2064
          %v2066 = vlaneseq
          %v2067 = vshrl.u32 %v2066, 7
          %vm2068 = vcmp.eq.s32.totalorder %v2067, 0
          %vm2069 = vcmp.eq.s32.totalorder %v2067, 1
          %vm2070 = vcmp.eq.s32.totalorder %v2067, 2
          %v2071 = vstv %s2065
          %v2072 = vsel %vm2070, %v2071, 0.0
          %v2073 = vstv %s1977
          %v2074 = vsel %vm2069, %v2073, %v2072
          %v2075 = vstv %s1889
          %v2076 = vsel %vm2068, %v2075, %v2074
          %2077 = vst [vmem:[%s262] sm:$0xff] %v2076
        $region60: #{tpu_custom_call.1} parent=31 // pred_fallthru
          _
        %s2078 = sand.u32 %s121, 1
        %s2079 = scalar_lea.sflag [#allocation7], %s2078
        %s2080 = sand.u32 %s121, 1
        %s2081 = smul.addr %s2080, 8
        %s2082 = scalar_lea.vmem [#allocation11], %s2081
        // Predicated region
        $region61: #{tpu_custom_call.1} parent=31 // pred_check
          %p2083 = pneg %p131
        $region62: #{tpu_custom_call.1} parent=31 // pred_check_branch
          %2085 = sbr.rel (%p2083) target = $region64
        $region63: #{tpu_custom_call.1} parent=31 // pred_region
          %s2087 = ssub.s32 128, 128
          %2088 = vsyncadd %s2079, %s2087
          %s2089 = smul.addr %s27, 128
          %s2090 = scalar_lea.hbm %s3, %s2089
          %s2092 = sshll.u32 %s2082, 4
          %s2093 = int_to_ptr.vmem [resolvable:$true] %s2092
          %2095 = dma.vmem_to_hbm [thread:$0]  %s2093, 128, %s2090, %s2079
        $region64: #{tpu_custom_call.1} parent=31 // pred_fallthru
          _
      $region32: #{tpu_custom_call.1} parent=5 // pred_fallthru
        _
      %p2096 = scmp.le.s32.totalorder 2, %s18
      // Predicated region
      $region65: #{tpu_custom_call.1} parent=5 // pred_check
        %p2097 = pneg %p2096
      $region66: #{tpu_custom_call.1} parent=5 // pred_check_branch
        %2099 = sbr.rel (%p2097) target = $region68
      $region67: #{tpu_custom_call.1} parent=5 // pred_region
        %s2100 = ssub.s32 %s18, 2
        // Predicated region
        $region69: #{tpu_custom_call.1} parent=67 // pred_check
          %p2101 = pneg %p137
        $region70: #{tpu_custom_call.1} parent=67 // pred_check_branch
          %2103 = sbr.rel (%p2101) target = $region72
        $region71: #{tpu_custom_call.1} parent=67 // pred_region
          %s2104 = sand.u32 %s122, 1
          %s2105 = scalar_lea.sflag [#allocation7], %s2104
          %s2106 = sand.u32 %s122, 1
          %s2107 = smul.addr %s2106, 8
          %s2108 = scalar_lea.vmem [#allocation11], %s2107
          %2109 = dma.done %s2105, 128
        $region72: #{tpu_custom_call.1} parent=67 // pred_fallthru
          _
      $region68: #{tpu_custom_call.1} parent=5 // pred_fallthru
        _
    $region6: #{tpu_custom_call.1} parent=1 // loop_footer
      %s22 = sadd.s32 1, %s18
    $region7: #{tpu_custom_call.1} parent=1 // loop_footer_branch
      %17 = sbr.rel target = $region3
    $region8: #{tpu_custom_call.1} parent=1 // loop_exit
      _
    %2110 = vsyncpa [#allocation6], 1
    %s2111 = scalar_lea.sflag [#allocation6], 1
    %2112 = vsyncpa %s2111, 1
    %2113 = vsyncpa [#allocation9], 1
    %s2114 = scalar_lea.sflag [#allocation9], 1
    %2115 = vsyncpa %s2114, 1
    %2116 = vsyncpa [#allocation7], 1
    %s2117 = scalar_lea.sflag [#allocation7], 1
    %2118 = vsyncpa %s2117, 1

</llo_original>
